<compile_context>
chip_gen: v6e
topology: v6e:2x2x1
jax: 0.10.0
libtpu: 0.0.40
codegen_flags: <defaults>
</compile_context>

<pallas_src>
import functools

import jax
import jax.numpy as jnp
from jax.experimental import pallas as pl
from jax.experimental.pallas import tpu as pltpu

_NEG_SLOPE = 0.01  # nn.LeakyReLU() default negative_slope

# Cap on one prepared dense matrix (elements) -- ~8 MiB bf16.  Keeps the lowering honest
# about only targeting small spatial inputs.
_MAX_DENSE_ELEMS = 4 * 1024 * 1024


def _conv5x5_s2_p2_as_matrix(w_hwio, Hi, Wi, *, nchw_out=False):
    """Fold Conv2d(K=5, S=2, P=2) (incl. zero padding and, optionally, the final NCHW-order
    flatten) into one dense matrix acting on an NHWC-flattened activation row.

    Returns (mat, (Ho, Wo, Co)) such that  y_flat = x_flat @ mat  reproduces the conv
    exactly.  Rows are (hi, wi, ci)-ordered (NHWC flat).  Columns are (ho, wo, co)-ordered
    (NHWC) by default or (co, ho, wo)-ordered (NCHW, i.e. torch .view(N, -1)) if nchw_out.
    """
    Kh, Kw, Ci, Co = w_hwio.shape
    S, P = 2, 2
    Ho = (Hi + 2 * P - Kh) // S + 1
    Wo = (Wi + 2 * P - Kw) // S + 1

    hi = jnp.arange(Hi)[:, None]
    wi = jnp.arange(Wi)[:, None]
    ho = jnp.arange(Ho)[None, :]
    wo = jnp.arange(Wo)[None, :]

    m6 = jnp.zeros((Hi, Wi, Ci, Ho, Wo, Co), jnp.float32)
    for kh in range(Kh):
        # Taps that fall in the zero padding match no input row -> contribute exactly 0.
        sel_h = (hi == S * ho + kh - P).astype(jnp.float32)        # (Hi, Ho)
        for kw in range(Kw):
            sel_w = (wi == S * wo + kw - P).astype(jnp.float32)    # (Wi, Wo)
            m6 = m6 + jnp.einsum("ap,bq,cd->abcpqd", sel_h, sel_w,
                                 w_hwio[kh, kw].astype(jnp.float32))
    if nchw_out:
        m6 = jnp.transpose(m6, (0, 1, 2, 5, 3, 4))                 # (..., co, ho, wo)
        mat = m6.reshape(Hi * Wi * Ci, Co * Ho * Wo)
    else:
        mat = m6.reshape(Hi * Wi * Ci, Ho * Wo * Co)
    return mat, (Ho, Wo, Co)


def prepare_flatten_params(params, hw):
    """Pre-lower the conv layers to (bf16 dense matrix, f32 flat bias) pairs.

    params: list of (w, b), w in HWIO layout (5, 5, Cin, Cout)
            (from a PyTorch OIHW tensor: w_hwio = w_torch.permute(2, 3, 1, 0)).
    hw:     (H, W) spatial size of the module input.
    """
    Hi, Wi = hw
    n_layers = len(params)
    prepared = []
    for l, (w, b) in enumerate(params):
        last = l == n_layers - 1
        mat, (Ho, Wo, Co) = _conv5x5_s2_p2_as_matrix(w, Hi, Wi, nchw_out=last)
        assert mat.shape[0] * mat.shape[1] <= _MAX_DENSE_ELEMS, (
            "dense conv->matmul lowering targets small spatial inputs; "
            f"layer {l} matrix {mat.shape} is too large -- use a tiled im2col kernel")
        b = b.astype(jnp.float32)
        # Bias per flat output column, matching the column ordering chosen above.
        b_flat = jnp.repeat(b, Ho * Wo) if last else jnp.tile(b, Ho * Wo)
        prepared.append((mat.astype(jnp.bfloat16), b_flat.reshape(1, -1)))
        Hi, Wi = Ho, Wo
    return tuple(prepared)


def _flatten_module_kernel(x_ref, *refs, n_layers):
    """refs = (w0, b0, w1, b1, ..., o_ref).  Full forward for one block of B samples."""
    o_ref = refs[2 * n_layers]
    act = x_ref[...]                                            # (B, H*W*C0) f32
    for l in range(n_layers):
        w_ref, b_ref = refs[2 * l], refs[2 * l + 1]
        y = jnp.dot(act.astype(jnp.bfloat16), w_ref[...],       # bf16 x bf16 MXU matmul,
                    preferred_element_type=jnp.float32)         # f32 accumulation
        y = y + b_ref[...]                                      # f32 bias
        act = jnp.maximum(y, _NEG_SLOPE * y)                    # LeakyReLU(0.01), f32 VPU
    o_ref[...] = act.astype(o_ref.dtype)                        # (B, Cf*Hf*Wf), NCHW order


def flatten_module_prepared(x_nchw, prepared):
    """Run the fused kernel given pre-lowered weights from prepare_flatten_params."""
    N, C0, H, W = x_nchw.shape
    F0 = H * W * C0
    Ff = prepared[-1][0].shape[1]
    n_layers = len(prepared)

    # Lane-dense input rows: NCHW -> NHWC -> (N, H*W*C0)  (one cheap XLA relayout).
    x_flat = jnp.transpose(x_nchw, (0, 2, 3, 1)).reshape(N, F0)

    # Batch blocking: G grid steps of B samples each.  Keep G == 2 when possible so a v7x
    # chip's two TensorCores each take a step; on v5e/v6e the grid is just a short loop.
    G = 2 if (N >= 2 and N % 2 == 0) else 1
    B = N // G
    x_blk = x_flat.reshape(G, B, F0)

    inputs = [x_blk]
    in_specs = [pl.BlockSpec((pl.Squeezed(), B, F0), lambda g: (g, 0, 0))]
    for mat, b_flat in prepared:
        k_dim, f_dim = mat.shape
        inputs += [mat, b_flat]
        in_specs += [pl.BlockSpec((k_dim, f_dim), lambda g: (0, 0)),
                     pl.BlockSpec((1, f_dim), lambda g: (0, 0))]

    kernel = functools.partial(_flatten_module_kernel, n_layers=n_layers)
    y = pl.pallas_call(
        kernel,
        out_shape=jax.ShapeDtypeStruct((G, B, Ff), jnp.float32),
        grid=(G,),
        in_specs=in_specs,
        out_specs=pl.BlockSpec((pl.Squeezed(), B, Ff), lambda g: (g, 0, 0)),
        compiler_params=pltpu.CompilerParams(dimension_semantics=("parallel",)),
    )(*inputs)

    # Rows are already in torch x.view(N, -1) (NCHW) order; this reshape is a free view.
    return y.reshape(N, Ff)


def flatten_module(x_nchw, params):
    """Equivalent of Flatten_Module.forward (isLocal is implied by the shapes in params)."""
    prepared = prepare_flatten_params(params, x_nchw.shape[2:])
    return flatten_module_prepared(x_nchw, prepared)


def init_params(key, in_ch, out_ch, is_local=True):
    chans = [in_ch, out_ch, out_ch * 2, out_ch * 4,
             out_ch * 8 if is_local else out_ch * 4]
    keys = jax.random.split(key, 8)
    params = []
    for i in range(4):
        ci, co = chans[i], chans[i + 1]
        w = 0.1 * jax.random.normal(keys[2 * i], (5, 5, ci, co), jnp.float32)
        b = 0.1 * jax.random.normal(keys[2 * i + 1], (co,), jnp.float32)
        # Round through bf16 so MXU bf16 products are exact for the weights.
        params.append((w.astype(jnp.bfloat16).astype(jnp.float32),
                       b.astype(jnp.bfloat16).astype(jnp.float32)))
    return params


def flatten_module_reference(x_nchw, params, bf16_matmul=False):
    """Pure-JAX reference (lax.conv) mirroring the PyTorch module.

    With bf16_matmul=True the conv operands are cast to bf16 (f32 accumulation), matching
    the kernel's MXU numerics; with False it is the exact f32 PyTorch-equivalent forward.
    """
    x = jnp.transpose(x_nchw, (0, 2, 3, 1))
    for (w, b) in params:
        lhs, rhs = x, w
        if bf16_matmul:
            lhs, rhs = x.astype(jnp.bfloat16), w.astype(jnp.bfloat16)
        x = jax.lax.conv_general_dilated(
            lhs, rhs, window_strides=(2, 2), padding=((2, 2), (2, 2)),
            dimension_numbers=("NHWC", "HWIO", "NHWC"),
            preferred_element_type=jnp.float32)
        x = x + b[None, None, None, :].astype(jnp.float32)
        x = jnp.where(x > 0, x, _NEG_SLOPE * x)
    x = jnp.transpose(x, (0, 3, 1, 2))
    return x.reshape(x.shape[0], -1)


if __name__ == "__main__":
    key = jax.random.PRNGKey(0)
    k_x, k_p = jax.random.split(key)

    N, C, S = 2, 4, 16  # batch=2, in_ch=out_ch=4, spatial=16x16
    x = jax.random.normal(k_x, (N, C, S, S), jnp.float32)
    x = x.astype(jnp.bfloat16).astype(jnp.float32)  # bf16-representable input
    params = init_params(k_p, C, C, is_local=True)

    y = jax.jit(flatten_module)(x, params)
    jax.block_until_ready(y)
    assert y.shape == (N, 8 * C) and y.dtype == jnp.float32  # (2, 32)

    # Tight check against a reference that mirrors the kernel's bf16 MXU operands.
    y_ref_bf16 = flatten_module_reference(x, params, bf16_matmul=True)
    err_bf16 = float(jnp.max(jnp.abs(y - y_ref_bf16)))
    assert err_bf16 < 1e-3, f"mismatch vs bf16-operand reference: max abs err = {err_bf16}"

    # Loose check against the exact-f32 PyTorch-equivalent reference (only bf16 operand
    # rounding of intermediate activations separates the two).
    y_ref_f32 = flatten_module_reference(x, params, bf16_matmul=False)
    err_f32 = float(jnp.max(jnp.abs(y - y_ref_f32)))
    assert err_f32 < 5e-2, f"mismatch vs f32 reference: max abs err = {err_f32}"

    print("KERNEL_OK")
</pallas_src>

<mosaic_0001>
module attributes {stable_mosaic.version = 11 : i64} {
  func.func @_flatten_module_kernel(%arg0: i32, %arg1: memref<1x1x1024xf32, #tpu.memory_space<vmem>>, %arg2: memref<1024x256xbf16, #tpu.memory_space<vmem>>, %arg3: memref<1x256xf32, #tpu.memory_space<vmem>>, %arg4: memref<256x128xbf16, #tpu.memory_space<vmem>>, %arg5: memref<1x128xf32, #tpu.memory_space<vmem>>, %arg6: memref<128x64xbf16, #tpu.memory_space<vmem>>, %arg7: memref<1x64xf32, #tpu.memory_space<vmem>>, %arg8: memref<64x32xbf16, #tpu.memory_space<vmem>>, %arg9: memref<1x32xf32, #tpu.memory_space<vmem>>, %arg10: memref<1x1x32xf32, #tpu.memory_space<vmem>>) attributes {dimension_semantics = [#tpu.dimension_semantics<parallel>], iteration_bounds = array<i64: 2>, scalar_prefetch = 0 : i64, scratch_operands = 0 : i64, tpu.core_type = #tpu.core_type<tc>, window_params = [{transform_indices = @transform_0, window_bounds = array<i64: 1, 1, 1024>}, {pipeline_mode = #tpu.pipeline_mode<synchronous>, transform_indices = @transform_1, window_bounds = array<i64: 1024, 256>}, {pipeline_mode = #tpu.pipeline_mode<synchronous>, transform_indices = @transform_2, window_bounds = array<i64: 1, 256>}, {pipeline_mode = #tpu.pipeline_mode<synchronous>, transform_indices = @transform_3, window_bounds = array<i64: 256, 128>}, {pipeline_mode = #tpu.pipeline_mode<synchronous>, transform_indices = @transform_4, window_bounds = array<i64: 1, 128>}, {pipeline_mode = #tpu.pipeline_mode<synchronous>, transform_indices = @transform_5, window_bounds = array<i64: 128, 64>}, {pipeline_mode = #tpu.pipeline_mode<synchronous>, transform_indices = @transform_6, window_bounds = array<i64: 1, 64>}, {pipeline_mode = #tpu.pipeline_mode<synchronous>, transform_indices = @transform_7, window_bounds = array<i64: 64, 32>}, {pipeline_mode = #tpu.pipeline_mode<synchronous>, transform_indices = @transform_8, window_bounds = array<i64: 1, 32>}, {transform_indices = @transform_9, window_bounds = array<i64: 1, 1, 32>}]} {
    %c0 = arith.constant 0 : index
    %c0_0 = arith.constant 0 : index
    %c0_1 = arith.constant 0 : index
    %0 = vector.load %arg1[%c0, %c0_0, %c0_1] : memref<1x1x1024xf32, #tpu.memory_space<vmem>>, vector<1x1x1024xf32>
    %1 = vector.shape_cast %0 : vector<1x1x1024xf32> to vector<1x1024xf32>
    %2 = arith.truncf %1 : vector<1x1024xf32> to vector<1x1024xbf16>
    %c0_2 = arith.constant 0 : index
    %c0_3 = arith.constant 0 : index
    %3 = vector.load %arg2[%c0_2, %c0_3] : memref<1024x256xbf16, #tpu.memory_space<vmem>>, vector<1024x256xbf16>
    %cst = arith.constant dense<0.000000e+00> : vector<1x256xf32>
    %4 = tpu.matmul %2, %3, %cst {dimension_numbers = #tpu.dot_dimension_numbers<[1], [0], [0], [1], [0, 0, 1, 1], [], []>} : vector<1x1024xbf16>, vector<1024x256xbf16>, vector<1x256xf32> -> vector<1x256xf32>
    %c0_4 = arith.constant 0 : index
    %c0_5 = arith.constant 0 : index
    %5 = vector.load %arg3[%c0_4, %c0_5] : memref<1x256xf32, #tpu.memory_space<vmem>>, vector<1x256xf32>
    %6 = arith.addf %4, %5 : vector<1x256xf32>
    %cst_6 = arith.constant 0.00999999977 : f32
    %7 = vector.broadcast %cst_6 : f32 to vector<1x256xf32>
    %8 = arith.mulf %7, %6 : vector<1x256xf32>
    %9 = arith.maximumf %6, %8 : vector<1x256xf32>
    %10 = arith.truncf %9 : vector<1x256xf32> to vector<1x256xbf16>
    %c0_7 = arith.constant 0 : index
    %c0_8 = arith.constant 0 : index
    %11 = vector.load %arg4[%c0_7, %c0_8] : memref<256x128xbf16, #tpu.memory_space<vmem>>, vector<256x128xbf16>
    %cst_9 = arith.constant dense<0.000000e+00> : vector<1x128xf32>
    %12 = tpu.matmul %10, %11, %cst_9 {dimension_numbers = #tpu.dot_dimension_numbers<[1], [0], [0], [1], [0, 0, 1, 1], [], []>} : vector<1x256xbf16>, vector<256x128xbf16>, vector<1x128xf32> -> vector<1x128xf32>
    %c0_10 = arith.constant 0 : index
    %c0_11 = arith.constant 0 : index
    %13 = vector.load %arg5[%c0_10, %c0_11] : memref<1x128xf32, #tpu.memory_space<vmem>>, vector<1x128xf32>
    %14 = arith.addf %12, %13 : vector<1x128xf32>
    %cst_12 = arith.constant 0.00999999977 : f32
    %15 = vector.broadcast %cst_12 : f32 to vector<1x128xf32>
    %16 = arith.mulf %15, %14 : vector<1x128xf32>
    %17 = arith.maximumf %14, %16 : vector<1x128xf32>
    %18 = arith.truncf %17 : vector<1x128xf32> to vector<1x128xbf16>
    %c0_13 = arith.constant 0 : index
    %c0_14 = arith.constant 0 : index
    %19 = vector.load %arg6[%c0_13, %c0_14] : memref<128x64xbf16, #tpu.memory_space<vmem>>, vector<128x64xbf16>
    %cst_15 = arith.constant dense<0.000000e+00> : vector<1x64xf32>
    %20 = tpu.matmul %18, %19, %cst_15 {dimension_numbers = #tpu.dot_dimension_numbers<[1], [0], [0], [1], [0, 0, 1, 1], [], []>} : vector<1x128xbf16>, vector<128x64xbf16>, vector<1x64xf32> -> vector<1x64xf32>
    %c0_16 = arith.constant 0 : index
    %c0_17 = arith.constant 0 : index
    %21 = vector.load %arg7[%c0_16, %c0_17] : memref<1x64xf32, #tpu.memory_space<vmem>>, vector<1x64xf32>
    %22 = arith.addf %20, %21 : vector<1x64xf32>
    %cst_18 = arith.constant 0.00999999977 : f32
    %23 = vector.broadcast %cst_18 : f32 to vector<1x64xf32>
    %24 = arith.mulf %23, %22 : vector<1x64xf32>
    %25 = arith.maximumf %22, %24 : vector<1x64xf32>
    %26 = arith.truncf %25 : vector<1x64xf32> to vector<1x64xbf16>
    %c0_19 = arith.constant 0 : index
    %c0_20 = arith.constant 0 : index
    %27 = vector.load %arg8[%c0_19, %c0_20] : memref<64x32xbf16, #tpu.memory_space<vmem>>, vector<64x32xbf16>
    %cst_21 = arith.constant dense<0.000000e+00> : vector<1x32xf32>
    %28 = tpu.matmul %26, %27, %cst_21 {dimension_numbers = #tpu.dot_dimension_numbers<[1], [0], [0], [1], [0, 0, 1, 1], [], []>} : vector<1x64xbf16>, vector<64x32xbf16>, vector<1x32xf32> -> vector<1x32xf32>
    %c0_22 = arith.constant 0 : index
    %c0_23 = arith.constant 0 : index
    %29 = vector.load %arg9[%c0_22, %c0_23] : memref<1x32xf32, #tpu.memory_space<vmem>>, vector<1x32xf32>
    %30 = arith.addf %28, %29 : vector<1x32xf32>
    %cst_24 = arith.constant 0.00999999977 : f32
    %31 = vector.broadcast %cst_24 : f32 to vector<1x32xf32>
    %32 = arith.mulf %31, %30 : vector<1x32xf32>
    %33 = arith.maximumf %30, %32 : vector<1x32xf32>
    %c0_25 = arith.constant 0 : index
    %c0_26 = arith.constant 0 : index
    %c0_27 = arith.constant 0 : index
    %34 = vector.load %arg10[%c0_25, %c0_26, %c0_27] : memref<1x1x32xf32, #tpu.memory_space<vmem>>, vector<1x1x32xf32>
    %35 = vector.shape_cast %34 : vector<1x1x32xf32> to vector<1x32xf32>
    %36 = vector.shape_cast %33 : vector<1x32xf32> to vector<1x1x32xf32>
    tpu.vector_store %arg10[%c0_25, %c0_26, %c0_27], %36 {strides = array<i32>} : memref<1x1x32xf32, #tpu.memory_space<vmem>>, vector<1x1x32xf32>,
    return
  }
  func.func @transform_0(%arg0: i32) -> (i32, i32, i32) {
    %c0_i32 = arith.constant 0 : i32
    %c0_i32_0 = arith.constant 0 : i32
    %c0_i32_1 = arith.constant 0 : i32
    return %arg0, %c0_i32, %c0_i32_0 : i32, i32, i32
  }
  func.func @transform_1(%arg0: i32) -> (i32, i32) {
    %c0_i32 = arith.constant 0 : i32
    %c0_i32_0 = arith.constant 0 : i32
    %c0_i32_1 = arith.constant 0 : i32
    return %c0_i32, %c0_i32_0 : i32, i32
  }
  func.func @transform_2(%arg0: i32) -> (i32, i32) {
    %c0_i32 = arith.constant 0 : i32
    %c0_i32_0 = arith.constant 0 : i32
    %c0_i32_1 = arith.constant 0 : i32
    return %c0_i32, %c0_i32_0 : i32, i32
  }
  func.func @transform_3(%arg0: i32) -> (i32, i32) {
    %c0_i32 = arith.constant 0 : i32
    %c0_i32_0 = arith.constant 0 : i32
    %c0_i32_1 = arith.constant 0 : i32
    return %c0_i32, %c0_i32_0 : i32, i32
  }
  func.func @transform_4(%arg0: i32) -> (i32, i32) {
    %c0_i32 = arith.constant 0 : i32
    %c0_i32_0 = arith.constant 0 : i32
    %c0_i32_1 = arith.constant 0 : i32
    return %c0_i32, %c0_i32_0 : i32, i32
  }
  func.func @transform_5(%arg0: i32) -> (i32, i32) {
    %c0_i32 = arith.constant 0 : i32
    %c0_i32_0 = arith.constant 0 : i32
    %c0_i32_1 = arith.constant 0 : i32
    return %c0_i32, %c0_i32_0 : i32, i32
  }
  func.func @transform_6(%arg0: i32) -> (i32, i32) {
    %c0_i32 = arith.constant 0 : i32
    %c0_i32_0 = arith.constant 0 : i32
    %c0_i32_1 = arith.constant 0 : i32
    return %c0_i32, %c0_i32_0 : i32, i32
  }
  func.func @transform_7(%arg0: i32) -> (i32, i32) {
    %c0_i32 = arith.constant 0 : i32
    %c0_i32_0 = arith.constant 0 : i32
    %c0_i32_1 = arith.constant 0 : i32
    return %c0_i32, %c0_i32_0 : i32, i32
  }
  func.func @transform_8(%arg0: i32) -> (i32, i32) {
    %c0_i32 = arith.constant 0 : i32
    %c0_i32_0 = arith.constant 0 : i32
    %c0_i32_1 = arith.constant 0 : i32
    return %c0_i32, %c0_i32_0 : i32, i32
  }
  func.func @transform_9(%arg0: i32) -> (i32, i32, i32) {
    %c0_i32 = arith.constant 0 : i32
    %c0_i32_0 = arith.constant 0 : i32
    %c0_i32_1 = arith.constant 0 : i32
    return %arg0, %c0_i32, %c0_i32_0 : i32, i32, i32
  }
}

</mosaic_0001>

<llo_original>
// kernel: tile.18
$region0: #{tile.18}
  #allocation0 [shape = 's32[1]{0}', space=sflag, size = 0x4, scoped, tag = 'scoped memory for tile.18']
  %s0 = inlined_call_operand.vmem [shape: f32[4], index: 0, kind: input, shape index: {}]
  %s1 = inlined_call_operand.vmem [shape: f32[64,4], index: 1, kind: output, shape index: {}]
  // Predicated region
  $region2: #{tile.18} parent=0 // pred_check
    _
  $region3: #{tile.18} parent=0 // pred_check_branch
    %3 = sbr.rel (0) target = $region5
  $region4: #{tile.18} parent=0 // pred_region
    _
  $region5: #{tile.18} parent=0 // pred_fallthru
    _
  %v4 = vld [vmem:[%s0] ss:$0 sm:$0xff]
  %5 = vst [vmem:[%s1] sm:$0xff] %v4
  %s6 = scalar_lea.vmem %s1, 8
  %7 = vst [vmem:[%s6] sm:$0xff] %v4
  %s8 = scalar_lea.vmem %s1, 16
  %9 = vst [vmem:[%s8] sm:$0xff] %v4
  %s10 = scalar_lea.vmem %s1, 24
  %11 = vst [vmem:[%s10] sm:$0xff] %v4
  %s12 = scalar_lea.vmem %s1, 32
  %13 = vst [vmem:[%s12] sm:$0xff] %v4
  %s14 = scalar_lea.vmem %s1, 40
  %15 = vst [vmem:[%s14] sm:$0xff] %v4
  %s16 = scalar_lea.vmem %s1, 48
  %17 = vst [vmem:[%s16] sm:$0xff] %v4
  %s18 = scalar_lea.vmem %s1, 56
  %19 = vst [vmem:[%s18] sm:$0xff] %v4

// kernel: tile.19
$region0: #{tile.19}
  %s0 = inlined_call_operand.vmem [shape: f32[64,4], index: 0, kind: input, shape index: {}]
  %s1 = inlined_call_operand.vmem [shape: f32[1,256], index: 1, kind: output, shape index: {}]
  $region1: #{tile.19} parent=0
    #allocation0 [shape = 'u8[8192]{0}', space=vmem, size = 0x2000, scoped, tag = 'scoped mem for output reshape']
    %v2 = vld [vmem:[%s0] sm:$0x1]
    %s3 = scalar_lea.vmem %s0, 31
    %v4 = vld [vmem:[%s3] sm:$0x2]
    %vm5 = vcmask 1041409
    %v6 = vsel %vm5, %v4, %v2
    %vm7 = vcmask 31744
    %8 = vst.msk [vmem:[#allocation0] ss:$8 sm:$0x3] %vm7, %v6
    %s9 = scalar_lea.vmem %s0, 31
    %v10 = vld [vmem:[%s9] sm:$0x1]
    %s11 = scalar_lea.vmem %s0, 62
    %v12 = vld [vmem:[%s11] sm:$0x2]
    %vm13 = vcmask 1041409
    %v14 = vsel %vm13, %v12, %v10
    %15 = vrot.lane.b32.xlu0 %v14, 124
    %v16 = vpop.permute.xlu0 %15
    %vm17 = vcmask 1048544
    %18 = vst.msk [vmem:[#allocation0] ss:$8 sm:$0x3] %vm17, %v16
    %s19 = scalar_lea.vmem %s0, 30
    %v20 = vld [vmem:[%s19] sm:$0x1]
    %s21 = scalar_lea.vmem %s0, 61
    %v22 = vld [vmem:[%s21] sm:$0x2]
    %vm23 = vcmask 1041409
    %v24 = vsel %vm23, %v22, %v20
    %25 = vrot.lane.b32.xlu0 %v24, 120
    %v26 = vpop.permute.xlu0 %25
    %vm27 = vcmask 1015744
    %28 = vst.msk [vmem:[#allocation0] ss:$8 sm:$0x3] %vm27, %v26
    %s29 = scalar_lea.vmem %s0, 29
    %v30 = vld [vmem:[%s29] sm:$0x1]
    %s31 = scalar_lea.vmem %s0, 60
    %v32 = vld [vmem:[%s31] sm:$0x2]
    %vm33 = vcmask 1041409
    %v34 = vsel %vm33, %v32, %v30
    %35 = vrot.lane.b32.xlu0 %v34, 116
    %v36 = vpop.permute.xlu0 %35
    %vm37 = vcmask 982944
    %38 = vst.msk [vmem:[#allocation0] ss:$8 sm:$0x3] %vm37, %v36
    %s39 = scalar_lea.vmem %s0, 28
    %v40 = vld [vmem:[%s39] sm:$0x1]
    %s41 = scalar_lea.vmem %s0, 59
    %v42 = vld [vmem:[%s41] sm:$0x2]
    %vm43 = vcmask 1041409
    %v44 = vsel %vm43, %v42, %v40
    %45 = vrot.lane.b32.xlu0 %v44, 112
    %v46 = vpop.permute.xlu0 %45
    %vm47 = vcmask 950144
    %48 = vst.msk [vmem:[#allocation0] ss:$8 sm:$0x3] %vm47, %v46
    %s49 = scalar_lea.vmem %s0, 27
    %v50 = vld [vmem:[%s49] sm:$0x1]
    %s51 = scalar_lea.vmem %s0, 58
    %v52 = vld [vmem:[%s51] sm:$0x2]
    %vm53 = vcmask 1041409
    %v54 = vsel %vm53, %v52, %v50
    %55 = vrot.lane.b32.xlu0 %v54, 108
    %v56 = vpop.permute.xlu0 %55
    %vm57 = vcmask 917344
    %58 = vst.msk [vmem:[#allocation0] ss:$8 sm:$0x3] %vm57, %v56
    %s59 = scalar_lea.vmem %s0, 26
    %v60 = vld [vmem:[%s59] sm:$0x1]
    %s61 = scalar_lea.vmem %s0, 57
    %v62 = vld [vmem:[%s61] sm:$0x2]
    %vm63 = vcmask 1041409
    %v64 = vsel %vm63, %v62, %v60
    %65 = vrot.lane.b32.xlu0 %v64, 104
    %v66 = vpop.permute.xlu0 %65
    %vm67 = vcmask 884544
    %68 = vst.msk [vmem:[#allocation0] ss:$8 sm:$0x3] %vm67, %v66
    %s69 = scalar_lea.vmem %s0, 25
    %v70 = vld [vmem:[%s69] sm:$0x1]
    %s71 = scalar_lea.vmem %s0, 56
    %v72 = vld [vmem:[%s71] sm:$0x2]
    %vm73 = vcmask 1041409
    %v74 = vsel %vm73, %v72, %v70
    %75 = vrot.lane.b32.xlu0 %v74, 100
    %v76 = vpop.permute.xlu0 %75
    %vm77 = vcmask 851744
    %78 = vst.msk [vmem:[#allocation0] ss:$8 sm:$0x3] %vm77, %v76
    %s79 = scalar_lea.vmem %s0, 24
    %v80 = vld [vmem:[%s79] sm:$0x1]
    %s81 = scalar_lea.vmem %s0, 55
    %v82 = vld [vmem:[%s81] sm:$0x2]
    %vm83 = vcmask 1041409
    %v84 = vsel %vm83, %v82, %v80
    %85 = vrot.lane.b32.xlu0 %v84, 96
    %v86 = vpop.permute.xlu0 %85
    %vm87 = vcmask 818944
    %88 = vst.msk [vmem:[#allocation0] ss:$8 sm:$0x3] %vm87, %v86
    %s89 = scalar_lea.vmem %s0, 23
    %v90 = vld [vmem:[%s89] sm:$0x1]
    %s91 = scalar_lea.vmem %s0, 54
    %v92 = vld [vmem:[%s91] sm:$0x2]
    %vm93 = vcmask 1041409
    %v94 = vsel %vm93, %v92, %v90
    %95 = vrot.lane.b32.xlu0 %v94, 92
    %v96 = vpop.permute.xlu0 %95
    %vm97 = vcmask 786144
    %98 = vst.msk [vmem:[#allocation0] ss:$8 sm:$0x3] %vm97, %v96
    %s99 = scalar_lea.vmem %s0, 22
    %v100 = vld [vmem:[%s99] sm:$0x1]
    %s101 = scalar_lea.vmem %s0, 53
    %v102 = vld [vmem:[%s101] sm:$0x2]
    %vm103 = vcmask 1041409
    %v104 = vsel %vm103, %v102, %v100
    %105 = vrot.lane.b32.xlu0 %v104, 88
    %v106 = vpop.permute.xlu0 %105
    %vm107 = vcmask 753344
    %108 = vst.msk [vmem:[#allocation0] ss:$8 sm:$0x3] %vm107, %v106
    %s109 = scalar_lea.vmem %s0, 21
    %v110 = vld [vmem:[%s109] sm:$0x1]
    %s111 = scalar_lea.vmem %s0, 52
    %v112 = vld [vmem:[%s111] sm:$0x2]
    %vm113 = vcmask 1041409
    %v114 = vsel %vm113, %v112, %v110
    %115 = vrot.lane.b32.xlu0 %v114, 84
    %v116 = vpop.permute.xlu0 %115
    %vm117 = vcmask 720544
    %118 = vst.msk [vmem:[#allocation0] ss:$8 sm:$0x3] %vm117, %v116
    %s119 = scalar_lea.vmem %s0, 20
    %v120 = vld [vmem:[%s119] sm:$0x1]
    %s121 = scalar_lea.vmem %s0, 51
    %v122 = vld [vmem:[%s121] sm:$0x2]
    %vm123 = vcmask 1041409
    %v124 = vsel %vm123, %v122, %v120
    %125 = vrot.lane.b32.xlu0 %v124, 80
    %v126 = vpop.permute.xlu0 %125
    %vm127 = vcmask 687744
    %128 = vst.msk [vmem:[#allocation0] ss:$8 sm:$0x3] %vm127, %v126
    %s129 = scalar_lea.vmem %s0, 19
    %v130 = vld [vmem:[%s129] sm:$0x1]
    %s131 = scalar_lea.vmem %s0, 50
    %v132 = vld [vmem:[%s131] sm:$0x2]
    %vm133 = vcmask 1041409
    %v134 = vsel %vm133, %v132, %v130
    %135 = vrot.lane.b32.xlu0 %v134, 76
    %v136 = vpop.permute.xlu0 %135
    %vm137 = vcmask 654944
    %138 = vst.msk [vmem:[#allocation0] ss:$8 sm:$0x3] %vm137, %v136
    %s139 = scalar_lea.vmem %s0, 18
    %v140 = vld [vmem:[%s139] sm:$0x1]
    %s141 = scalar_lea.vmem %s0, 49
    %v142 = vld [vmem:[%s141] sm:$0x2]
    %vm143 = vcmask 1041409
    %v144 = vsel %vm143, %v142, %v140
    %145 = vrot.lane.b32.xlu0 %v144, 72
    %v146 = vpop.permute.xlu0 %145
    %vm147 = vcmask 622144
    %148 = vst.msk [vmem:[#allocation0] ss:$8 sm:$0x3] %vm147, %v146
    %s149 = scalar_lea.vmem %s0, 17
    %v150 = vld [vmem:[%s149] sm:$0x1]
    %s151 = scalar_lea.vmem %s0, 48
    %v152 = vld [vmem:[%s151] sm:$0x2]
    %vm153 = vcmask 1041409
    %v154 = vsel %vm153, %v152, %v150
    %155 = vrot.lane.b32.xlu0 %v154, 68
    %v156 = vpop.permute.xlu0 %155
    %vm157 = vcmask 589344
    %158 = vst.msk [vmem:[#allocation0] ss:$8 sm:$0x3] %vm157, %v156
    %s159 = scalar_lea.vmem %s0, 16
    %v160 = vld [vmem:[%s159] sm:$0x1]
    %s161 = scalar_lea.vmem %s0, 47
    %v162 = vld [vmem:[%s161] sm:$0x2]
    %vm163 = vcmask 1041409
    %v164 = vsel %vm163, %v162, %v160
    %165 = vrot.lane.b32.xlu0 %v164, 64
    %v166 = vpop.permute.xlu0 %165
    %vm167 = vcmask 556544
    %168 = vst.msk [vmem:[#allocation0] ss:$8 sm:$0x3] %vm167, %v166
    %s169 = scalar_lea.vmem %s0, 15
    %v170 = vld [vmem:[%s169] sm:$0x1]
    %s171 = scalar_lea.vmem %s0, 46
    %v172 = vld [vmem:[%s171] sm:$0x2]
    %vm173 = vcmask 1041409
    %v174 = vsel %vm173, %v172, %v170
    %175 = vrot.lane.b32.xlu0 %v174, 60
    %v176 = vpop.permute.xlu0 %175
    %vm177 = vcmask 523744
    %178 = vst.msk [vmem:[#allocation0] ss:$8 sm:$0x3] %vm177, %v176
    %s179 = scalar_lea.vmem %s0, 14
    %v180 = vld [vmem:[%s179] sm:$0x1]
    %s181 = scalar_lea.vmem %s0, 45
    %v182 = vld [vmem:[%s181] sm:$0x2]
    %vm183 = vcmask 1041409
    %v184 = vsel %vm183, %v182, %v180
    %185 = vrot.lane.b32.xlu0 %v184, 56
    %v186 = vpop.permute.xlu0 %185
    %vm187 = vcmask 490944
    %188 = vst.msk [vmem:[#allocation0] ss:$8 sm:$0x3] %vm187, %v186
    %s189 = scalar_lea.vmem %s0, 13
    %v190 = vld [vmem:[%s189] sm:$0x1]
    %s191 = scalar_lea.vmem %s0, 44
    %v192 = vld [vmem:[%s191] sm:$0x2]
    %vm193 = vcmask 1041409
    %v194 = vsel %vm193, %v192, %v190
    %195 = vrot.lane.b32.xlu0 %v194, 52
    %v196 = vpop.permute.xlu0 %195
    %vm197 = vcmask 458144
    %198 = vst.msk [vmem:[#allocation0] ss:$8 sm:$0x3] %vm197, %v196
    %s199 = scalar_lea.vmem %s0, 12
    %v200 = vld [vmem:[%s199] sm:$0x1]
    %s201 = scalar_lea.vmem %s0, 43
    %v202 = vld [vmem:[%s201] sm:$0x2]
    %vm203 = vcmask 1041409
    %v204 = vsel %vm203, %v202, %v200
    %205 = vrot.lane.b32.xlu0 %v204, 48
    %v206 = vpop.permute.xlu0 %205
    %vm207 = vcmask 425344
    %208 = vst.msk [vmem:[#allocation0] ss:$8 sm:$0x3] %vm207, %v206
    %s209 = scalar_lea.vmem %s0, 11
    %v210 = vld [vmem:[%s209] sm:$0x1]
    %s211 = scalar_lea.vmem %s0, 42
    %v212 = vld [vmem:[%s211] sm:$0x2]
    %vm213 = vcmask 1041409
    %v214 = vsel %vm213, %v212, %v210
    %215 = vrot.lane.b32.xlu0 %v214, 44
    %v216 = vpop.permute.xlu0 %215
    %vm217 = vcmask 392544
    %218 = vst.msk [vmem:[#allocation0] ss:$8 sm:$0x3] %vm217, %v216
    %s219 = scalar_lea.vmem %s0, 10
    %v220 = vld [vmem:[%s219] sm:$0x1]
    %s221 = scalar_lea.vmem %s0, 41
    %v222 = vld [vmem:[%s221] sm:$0x2]
    %vm223 = vcmask 1041409
    %v224 = vsel %vm223, %v222, %v220
    %225 = vrot.lane.b32.xlu0 %v224, 40
    %v226 = vpop.permute.xlu0 %225
    %vm227 = vcmask 359744
    %228 = vst.msk [vmem:[#allocation0] ss:$8 sm:$0x3] %vm227, %v226
    %s229 = scalar_lea.vmem %s0, 9
    %v230 = vld [vmem:[%s229] sm:$0x1]
    %s231 = scalar_lea.vmem %s0, 40
    %v232 = vld [vmem:[%s231] sm:$0x2]
    %vm233 = vcmask 1041409
    %v234 = vsel %vm233, %v232, %v230
    %235 = vrot.lane.b32.xlu0 %v234, 36
    %v236 = vpop.permute.xlu0 %235
    %vm237 = vcmask 326944
    %238 = vst.msk [vmem:[#allocation0] ss:$8 sm:$0x3] %vm237, %v236
    %s239 = scalar_lea.vmem %s0, 8
    %v240 = vld [vmem:[%s239] sm:$0x1]
    %s241 = scalar_lea.vmem %s0, 39
    %v242 = vld [vmem:[%s241] sm:$0x2]
    %vm243 = vcmask 1041409
    %v244 = vsel %vm243, %v242, %v240
    %245 = vrot.lane.b32.xlu0 %v244, 32
    %v246 = vpop.permute.xlu0 %245
    %vm247 = vcmask 294144
    %248 = vst.msk [vmem:[#allocation0] ss:$8 sm:$0x3] %vm247, %v246
    %s249 = scalar_lea.vmem %s0, 7
    %v250 = vld [vmem:[%s249] sm:$0x1]
    %s251 = scalar_lea.vmem %s0, 38
    %v252 = vld [vmem:[%s251] sm:$0x2]
    %vm253 = vcmask 1041409
    %v254 = vsel %vm253, %v252, %v250
    %255 = vrot.lane.b32.xlu0 %v254, 28
    %v256 = vpop.permute.xlu0 %255
    %vm257 = vcmask 261344
    %258 = vst.msk [vmem:[#allocation0] ss:$8 sm:$0x3] %vm257, %v256
    %s259 = scalar_lea.vmem %s0, 6
    %v260 = vld [vmem:[%s259] sm:$0x1]
    %s261 = scalar_lea.vmem %s0, 37
    %v262 = vld [vmem:[%s261] sm:$0x2]
    %vm263 = vcmask 1041409
    %v264 = vsel %vm263, %v262, %v260
    %265 = vrot.lane.b32.xlu0 %v264, 24
    %v266 = vpop.permute.xlu0 %265
    %vm267 = vcmask 228544
    %268 = vst.msk [vmem:[#allocation0] ss:$8 sm:$0x3] %vm267, %v266
    %s269 = scalar_lea.vmem %s0, 5
    %v270 = vld [vmem:[%s269] sm:$0x1]
    %s271 = scalar_lea.vmem %s0, 36
    %v272 = vld [vmem:[%s271] sm:$0x2]
    %vm273 = vcmask 1041409
    %v274 = vsel %vm273, %v272, %v270
    %275 = vrot.lane.b32.xlu0 %v274, 20
    %v276 = vpop.permute.xlu0 %275
    %vm277 = vcmask 195744
    %278 = vst.msk [vmem:[#allocation0] ss:$8 sm:$0x3] %vm277, %v276
    %s279 = scalar_lea.vmem %s0, 4
    %v280 = vld [vmem:[%s279] sm:$0x1]
    %s281 = scalar_lea.vmem %s0, 35
    %v282 = vld [vmem:[%s281] sm:$0x2]
    %vm283 = vcmask 1041409
    %v284 = vsel %vm283, %v282, %v280
    %285 = vrot.lane.b32.xlu0 %v284, 16
    %v286 = vpop.permute.xlu0 %285
    %vm287 = vcmask 162944
    %288 = vst.msk [vmem:[#allocation0] ss:$8 sm:$0x3] %vm287, %v286
    %s289 = scalar_lea.vmem %s0, 3
    %v290 = vld [vmem:[%s289] sm:$0x1]
    %s291 = scalar_lea.vmem %s0, 34
    %v292 = vld [vmem:[%s291] sm:$0x2]
    %vm293 = vcmask 1041409
    %v294 = vsel %vm293, %v292, %v290
    %295 = vrot.lane.b32.xlu0 %v294, 12
    %v296 = vpop.permute.xlu0 %295
    %vm297 = vcmask 130144
    %298 = vst.msk [vmem:[#allocation0] ss:$8 sm:$0x3] %vm297, %v296
    %s299 = scalar_lea.vmem %s0, 2
    %v300 = vld [vmem:[%s299] sm:$0x1]
    %s301 = scalar_lea.vmem %s0, 33
    %v302 = vld [vmem:[%s301] sm:$0x2]
    %vm303 = vcmask 1041409
    %v304 = vsel %vm303, %v302, %v300
    %305 = vrot.lane.b32.xlu0 %v304, 8
    %v306 = vpop.permute.xlu0 %305
    %vm307 = vcmask 97344
    %308 = vst.msk [vmem:[#allocation0] ss:$8 sm:$0x3] %vm307, %v306
    %s309 = scalar_lea.vmem %s0, 1
    %v310 = vld [vmem:[%s309] sm:$0x1]
    %s311 = scalar_lea.vmem %s0, 32
    %v312 = vld [vmem:[%s311] sm:$0x2]
    %vm313 = vcmask 1041409
    %v314 = vsel %vm313, %v312, %v310
    %315 = vrot.lane.b32.xlu0 %v314, 4
    %v316 = vpop.permute.xlu0 %315
    %vm317 = vcmask 64544
    %318 = vst.msk [vmem:[#allocation0] ss:$8 sm:$0x3] %vm317, %v316
    %s320 = sshll.u32 1, 1
    %s321 = ssub.s32 %s320, 1
    %v323 = vld [vmem:[#allocation0] sm:%s321]
    %s324 = sshll.u32 1, 1
    %s325 = ssub.s32 %s324, 1
    %326 = vst [vmem:[%s1] sm:%s325] %v323
    %s327 = scalar_lea.vmem [#allocation0], 8
    %v328 = vld [vmem:[%s327] sm:%s321]
    %s329 = sshll.u32 1, 1
    %s330 = ssub.s32 %s329, 1
    %s331 = scalar_lea.vmem %s1, 1
    %332 = vst [vmem:[%s331] sm:%s330] %v328

// kernel: tile.23
$region0: #{tile.23}
  #allocation0 [shape = 's32[1]{0}', space=sflag, size = 0x4, scoped, tag = 'scoped memory for tile.23']
  %s0 = inlined_call_operand.vmem [shape: f32[8], index: 0, kind: input, shape index: {}]
  %s1 = inlined_call_operand.vmem [shape: f32[16,8], index: 1, kind: output, shape index: {}]
  // Predicated region
  $region2: #{tile.23} parent=0 // pred_check
    _
  $region3: #{tile.23} parent=0 // pred_check_branch
    %3 = sbr.rel (0) target = $region5
  $region4: #{tile.23} parent=0 // pred_region
    _
  $region5: #{tile.23} parent=0 // pred_fallthru
    _
  %v4 = vld [vmem:[%s0] ss:$0 sm:$0xff]
  %5 = vst [vmem:[%s1] sm:$0xff] %v4
  %s6 = scalar_lea.vmem %s1, 8
  %7 = vst [vmem:[%s6] sm:$0xff] %v4

// kernel: tile.24
$region0: #{tile.24}
  %s0 = inlined_call_operand.vmem [shape: f32[16,8], index: 0, kind: input, shape index: {}]
  %s1 = inlined_call_operand.vmem [shape: f32[1,128], index: 1, kind: output, shape index: {}]
  $region1: #{tile.24} parent=0
    #allocation0 [shape = 'u8[4096]{0}', space=vmem, size = 0x1000, scoped, tag = 'scoped mem for output reshape']
    %v2 = vld [vmem:[%s0] sm:$0x1]
    %vm3 = vcmask 64512
    %4 = vst.msk [vmem:[#allocation0] sm:$0x1] %vm3, %v2
    %s5 = scalar_lea.vmem %s0, 15
    %v6 = vld [vmem:[%s5] sm:$0x1]
    %7 = vrot.lane.b32.xlu0 %v6, 120
    %v8 = vpop.permute.xlu0 %7
    %vm9 = vcmask 1048512
    %10 = vst.msk [vmem:[#allocation0] sm:$0x1] %vm9, %v8
    %s11 = scalar_lea.vmem %s0, 14
    %v12 = vld [vmem:[%s11] sm:$0x1]
    %13 = vrot.lane.b32.xlu0 %v12, 112
    %v14 = vpop.permute.xlu0 %13
    %vm15 = vcmask 982912
    %16 = vst.msk [vmem:[#allocation0] sm:$0x1] %vm15, %v14
    %s17 = scalar_lea.vmem %s0, 13
    %v18 = vld [vmem:[%s17] sm:$0x1]
    %19 = vrot.lane.b32.xlu0 %v18, 104
    %v20 = vpop.permute.xlu0 %19
    %vm21 = vcmask 917312
    %22 = vst.msk [vmem:[#allocation0] sm:$0x1] %vm21, %v20
    %s23 = scalar_lea.vmem %s0, 12
    %v24 = vld [vmem:[%s23] sm:$0x1]
    %25 = vrot.lane.b32.xlu0 %v24, 96
    %v26 = vpop.permute.xlu0 %25
    %vm27 = vcmask 851712
    %28 = vst.msk [vmem:[#allocation0] sm:$0x1] %vm27, %v26
    %s29 = scalar_lea.vmem %s0, 11
    %v30 = vld [vmem:[%s29] sm:$0x1]
    %31 = vrot.lane.b32.xlu0 %v30, 88
    %v32 = vpop.permute.xlu0 %31
    %vm33 = vcmask 786112
    %34 = vst.msk [vmem:[#allocation0] sm:$0x1] %vm33, %v32
    %s35 = scalar_lea.vmem %s0, 10
    %v36 = vld [vmem:[%s35] sm:$0x1]
    %37 = vrot.lane.b32.xlu0 %v36, 80
    %v38 = vpop.permute.xlu0 %37
    %vm39 = vcmask 720512
    %40 = vst.msk [vmem:[#allocation0] sm:$0x1] %vm39, %v38
    %s41 = scalar_lea.vmem %s0, 9
    %v42 = vld [vmem:[%s41] sm:$0x1]
    %43 = vrot.lane.b32.xlu0 %v42, 72
    %v44 = vpop.permute.xlu0 %43
    %vm45 = vcmask 654912
    %46 = vst.msk [vmem:[#allocation0] sm:$0x1] %vm45, %v44
    %s47 = scalar_lea.vmem %s0, 8
    %v48 = vld [vmem:[%s47] sm:$0x1]
    %49 = vrot.lane.b32.xlu0 %v48, 64
    %v50 = vpop.permute.xlu0 %49
    %vm51 = vcmask 589312
    %52 = vst.msk [vmem:[#allocation0] sm:$0x1] %vm51, %v50
    %s53 = scalar_lea.vmem %s0, 7
    %v54 = vld [vmem:[%s53] sm:$0x1]
    %55 = vrot.lane.b32.xlu0 %v54, 56
    %v56 = vpop.permute.xlu0 %55
    %vm57 = vcmask 523712
    %58 = vst.msk [vmem:[#allocation0] sm:$0x1] %vm57, %v56
    %s59 = scalar_lea.vmem %s0, 6
    %v60 = vld [vmem:[%s59] sm:$0x1]
    %61 = vrot.lane.b32.xlu0 %v60, 48
    %v62 = vpop.permute.xlu0 %61
    %vm63 = vcmask 458112
    %64 = vst.msk [vmem:[#allocation0] sm:$0x1] %vm63, %v62
    %s65 = scalar_lea.vmem %s0, 5
    %v66 = vld [vmem:[%s65] sm:$0x1]
    %67 = vrot.lane.b32.xlu0 %v66, 40
    %v68 = vpop.permute.xlu0 %67
    %vm69 = vcmask 392512
    %70 = vst.msk [vmem:[#allocation0] sm:$0x1] %vm69, %v68
    %s71 = scalar_lea.vmem %s0, 4
    %v72 = vld [vmem:[%s71] sm:$0x1]
    %73 = vrot.lane.b32.xlu0 %v72, 32
    %v74 = vpop.permute.xlu0 %73
    %vm75 = vcmask 326912
    %76 = vst.msk [vmem:[#allocation0] sm:$0x1] %vm75, %v74
    %s77 = scalar_lea.vmem %s0, 3
    %v78 = vld [vmem:[%s77] sm:$0x1]
    %79 = vrot.lane.b32.xlu0 %v78, 24
    %v80 = vpop.permute.xlu0 %79
    %vm81 = vcmask 261312
    %82 = vst.msk [vmem:[#allocation0] sm:$0x1] %vm81, %v80
    %s83 = scalar_lea.vmem %s0, 2
    %v84 = vld [vmem:[%s83] sm:$0x1]
    %85 = vrot.lane.b32.xlu0 %v84, 16
    %v86 = vpop.permute.xlu0 %85
    %vm87 = vcmask 195712
    %88 = vst.msk [vmem:[#allocation0] sm:$0x1] %vm87, %v86
    %s89 = scalar_lea.vmem %s0, 1
    %v90 = vld [vmem:[%s89] sm:$0x1]
    %91 = vrot.lane.b32.xlu0 %v90, 8
    %v92 = vpop.permute.xlu0 %91
    %vm93 = vcmask 130112
    %94 = vst.msk [vmem:[#allocation0] sm:$0x1] %vm93, %v92
    %s96 = sshll.u32 1, 1
    %s97 = ssub.s32 %s96, 1
    %v99 = vld [vmem:[#allocation0] sm:%s97]
    %s100 = sshll.u32 1, 1
    %s101 = ssub.s32 %s100, 1
    %102 = vst [vmem:[%s1] sm:%s101] %v99

// kernel: tile.28
$region0: #{tile.28}
  #allocation0 [shape = 's32[1]{0}', space=sflag, size = 0x4, scoped, tag = 'scoped memory for tile.28']
  %s0 = inlined_call_operand.vmem [shape: f32[16], index: 0, kind: input, shape index: {}]
  %s1 = inlined_call_operand.vmem [shape: f32[4,16], index: 1, kind: output, shape index: {}]
  // Predicated region
  $region2: #{tile.28} parent=0 // pred_check
    _
  $region3: #{tile.28} parent=0 // pred_check_branch
    %3 = sbr.rel (0) target = $region5
  $region4: #{tile.28} parent=0 // pred_region
    _
  $region5: #{tile.28} parent=0 // pred_fallthru
    _
  %v4 = vld [vmem:[%s0] ss:$0 sm:$0xff]
  %5 = vst [vmem:[%s1] sm:$0xf] %v4

// kernel: tile.29
$region0: #{tile.29}
  %s0 = inlined_call_operand.vmem [shape: f32[4,16], index: 0, kind: input, shape index: {}]
  %s1 = inlined_call_operand.vmem [shape: f32[1,64], index: 1, kind: output, shape index: {}]
  $region1: #{tile.29} parent=0
    #allocation0 [shape = 'u8[4096]{0}', space=vmem, size = 0x1000, scoped, tag = 'scoped mem for output reshape']
    #allocation1 [shape = 'u8[4096]{0}', space=vmem, size = 0x1000, scoped, tag = 'scoped mem for input reshape']
    %s3 = sshll.u32 1, 4
    %s4 = ssub.s32 %s3, 1
    %v5 = vld [vmem:[%s0] sm:%s4]
    %6 = vst [vmem:[#allocation1] sm:%s4] %v5
    %v7 = vld [vmem:[#allocation1] sm:$0x1]
    %vm8 = vcmask 130048
    %9 = vst.msk [vmem:[#allocation0] sm:$0x1] %vm8, %v7
    %s10 = scalar_lea.vmem [#allocation1], 3
    %v11 = vld [vmem:[%s10] sm:$0x1]
    %12 = vrot.lane.b32.xlu0 %v11, 48
    %v13 = vpop.permute.xlu0 %12
    %vm14 = vcmask 523648
    %15 = vst.msk [vmem:[#allocation0] sm:$0x1] %vm14, %v13
    %s16 = scalar_lea.vmem [#allocation1], 2
    %v17 = vld [vmem:[%s16] sm:$0x1]
    %18 = vrot.lane.b32.xlu0 %v17, 32
    %v19 = vpop.permute.xlu0 %18
    %vm20 = vcmask 392448
    %21 = vst.msk [vmem:[#allocation0] sm:$0x1] %vm20, %v19
    %s22 = scalar_lea.vmem [#allocation1], 1
    %v23 = vld [vmem:[%s22] sm:$0x1]
    %24 = vrot.lane.b32.xlu0 %v23, 16
    %v25 = vpop.permute.xlu0 %24
    %vm26 = vcmask 261248
    %27 = vst.msk [vmem:[#allocation0] sm:$0x1] %vm26, %v25
    %s29 = sshll.u32 1, 1
    %s30 = ssub.s32 %s29, 1
    %v32 = vld [vmem:[#allocation0] sm:%s30]
    %s33 = sshll.u32 1, 1
    %s34 = ssub.s32 %s33, 1
    %35 = vst [vmem:[%s1] sm:%s34] %v32

// kernel: flatten_module.1
$region0: #{flatten_module.1}
  #allocation0 [shape = 'u32[]', space=smem, size = 0x4, offset = 0x4, fixed_abs, tag = 'smem constant byte address 0x4 - core index']
  #allocation1 [shape = 'u32[144,128]{1,0:T(1,128)}', space=vmem, size = 0x12000, scoped, tag = 'internal scratch']
  %s0 = inlined_call_operand.vmem [shape: f32[2,1,1024], index: 0, kind: input, shape index: {}]
  %s1 = inlined_call_operand.vmem [shape: bf16[1024,256], index: 1, kind: input, shape index: {}]
  %s2 = inlined_call_operand.vmem [shape: f32[1,256], index: 2, kind: input, shape index: {}]
  %s3 = inlined_call_operand.vmem [shape: bf16[256,128], index: 3, kind: input, shape index: {}]
  %s4 = inlined_call_operand.vmem [shape: f32[1,128], index: 4, kind: input, shape index: {}]
  %s5 = inlined_call_operand.vmem [shape: bf16[128,64], index: 5, kind: input, shape index: {}]
  %s6 = inlined_call_operand.vmem [shape: f32[1,64], index: 6, kind: input, shape index: {}]
  %s7 = inlined_call_operand.vmem [shape: bf16[64,32], index: 7, kind: input, shape index: {}]
  %s8 = inlined_call_operand.vmem [shape: f32[1,32], index: 8, kind: input, shape index: {}]
  %s9 = inlined_call_operand.hbm [shape: f32[2,1,32], index: 9, kind: output, shape index: {}]
  %s10 = sld [smem:[#allocation0]]
  $region69: #{flatten_module.1} parent=0
    _
  %s12 = ssub.s32 1, %s10
  %s13 = scalar_select 0, %s12, %s10
  $region1: #{flatten_module.1} parent=0
    #allocation2 [shape = 'u8[1024]{0}', space=vmem, size = 0x400, scoped, tag = 'output window, operand 0']
    #allocation3 [shape = 's32[2]{0}', space=sflag, size = 0x8, scoped, tag = 'scoped memory for flatten_module.1']
    %14 = vsyncpa [#allocation3], 0
    %s15 = scalar_lea.sflag [#allocation3], 1
    %16 = vsyncpa %s15, 0
    loop: start=0, step=1, limit=4
    $region2: #{flatten_module.1} parent=1 // loop_pre_header
      _
    $region3: #{flatten_module.1} parent=1 // loop_header
      %s18 = sphi 0, %s22
      %p19 = scmp.ge.s32.totalorder %s18, 4
      %s28 = sphi 0, %s30
      %s31 = sphi 0, %s28
      %s32 = sphi 0, %s31
      %s48 = sphi 0, %s32
      %s52 = sphi 0, %s52
      %s54 = sphi 0, %s52
      %s55 = sphi 0, %s54
      %s69 = sphi 0, %s55
      %s73 = sphi 0, %s73
      %s75 = sphi 0, %s73
      %s76 = sphi 0, %s75
      %s90 = sphi 0, %s76
      %s94 = sphi 0, %s94
      %s96 = sphi 0, %s94
      %s97 = sphi 0, %s96
      %s111 = sphi 0, %s97
      %s115 = sphi 0, %s115
      %s117 = sphi 0, %s115
      %s118 = sphi 0, %s117
      %s132 = sphi 0, %s118
      %s136 = sphi 0, %s136
      %s138 = sphi 0, %s136
      %s139 = sphi 0, %s138
      %s153 = sphi 0, %s139
      %s157 = sphi 0, %s157
      %s159 = sphi 0, %s157
      %s160 = sphi 0, %s159
      %s174 = sphi 0, %s160
      %s178 = sphi 0, %s178
      %s180 = sphi 0, %s178
      %s181 = sphi 0, %s180
      %s195 = sphi 0, %s181
      %s199 = sphi 0, %s199
      %s201 = sphi 0, %s199
      %s202 = sphi 0, %s201
      %s216 = sphi 0, %s202
      %s222 = sphi 0, %s224
      %s225 = sphi 0, %s222
      %s226 = sphi 0, %s225
      %s242 = sphi 0, %s226
    $region4: #{flatten_module.1} parent=1 // loop_header_branch
      %21 = sbr.rel (%p19) target = $region8
    $region5: #{flatten_module.1} parent=1 // loop_body
      %s23 = ssub.s32 %s18, 1
      %s24 = ssub.s32 %s18, 2
      %s25 = sadd.s32 %s18, 1
      %s26 = ssub.s32 %s18, %s25
      %p27 = scmp.eq.s32.totalorder %s26, 0
      %s29 = sadd.s32 %s28, 1
      %s30 = scalar_select %p27, %s28, %s29
      %p33 = pneg %p27
      %p34 = scmp.eq.s32.totalorder %s18, 1
      %p35 = por %p33, %p34
      %p36 = scmp.ne.s32.totalorder %s28, %s31
      %p37 = scmp.eq.s32.totalorder %s18, 0
      %p38 = por %p36, %p37
      %p39 = scmp.ne.s32.totalorder %s28, %s31
      %p40 = scmp.eq.s32.totalorder %s23, 1
      %p41 = por %p39, %p40
      %p42 = scmp.ne.s32.totalorder %s31, %s32
      %p43 = scmp.eq.s32.totalorder %s23, 0
      %p44 = por %p42, %p43
      %p45 = scmp.ne.s32.totalorder %s31, %s32
      %p46 = scmp.eq.s32.totalorder %s24, 1
      %p47 = por %p45, %p46
      %p49 = scmp.ne.s32.totalorder %s32, %s48
      %p50 = scmp.eq.s32.totalorder %s24, 0
      %p51 = por %p49, %p50
      %s53 = sadd.s32 %s52, 1
      %p56 = scmp.eq.s32.totalorder %s18, 1
      %p57 = scmp.ne.s32.totalorder %s52, %s54
      %p58 = scmp.eq.s32.totalorder %s18, 0
      %p59 = por %p57, %p58
      %p60 = scmp.ne.s32.totalorder %s52, %s54
      %p61 = scmp.eq.s32.totalorder %s23, 1
      %p62 = por %p60, %p61
      %p63 = scmp.ne.s32.totalorder %s54, %s55
      %p64 = scmp.eq.s32.totalorder %s23, 0
      %p65 = por %p63, %p64
      %p66 = scmp.ne.s32.totalorder %s54, %s55
      %p67 = scmp.eq.s32.totalorder %s24, 1
      %p68 = por %p66, %p67
      %p70 = scmp.ne.s32.totalorder %s55, %s69
      %p71 = scmp.eq.s32.totalorder %s24, 0
      %p72 = por %p70, %p71
      %s74 = sadd.s32 %s73, 1
      %p77 = scmp.eq.s32.totalorder %s18, 1
      %p78 = scmp.ne.s32.totalorder %s73, %s75
      %p79 = scmp.eq.s32.totalorder %s18, 0
      %p80 = por %p78, %p79
      %p81 = scmp.ne.s32.totalorder %s73, %s75
      %p82 = scmp.eq.s32.totalorder %s23, 1
      %p83 = por %p81, %p82
      %p84 = scmp.ne.s32.totalorder %s75, %s76
      %p85 = scmp.eq.s32.totalorder %s23, 0
      %p86 = por %p84, %p85
      %p87 = scmp.ne.s32.totalorder %s75, %s76
      %p88 = scmp.eq.s32.totalorder %s24, 1
      %p89 = por %p87, %p88
      %p91 = scmp.ne.s32.totalorder %s76, %s90
      %p92 = scmp.eq.s32.totalorder %s24, 0
      %p93 = por %p91, %p92
      %s95 = sadd.s32 %s94, 1
      %p98 = scmp.eq.s32.totalorder %s18, 1
      %p99 = scmp.ne.s32.totalorder %s94, %s96
      %p100 = scmp.eq.s32.totalorder %s18, 0
      %p101 = por %p99, %p100
      %p102 = scmp.ne.s32.totalorder %s94, %s96
      %p103 = scmp.eq.s32.totalorder %s23, 1
      %p104 = por %p102, %p103
      %p105 = scmp.ne.s32.totalorder %s96, %s97
      %p106 = scmp.eq.s32.totalorder %s23, 0
      %p107 = por %p105, %p106
      %p108 = scmp.ne.s32.totalorder %s96, %s97
      %p109 = scmp.eq.s32.totalorder %s24, 1
      %p110 = por %p108, %p109
      %p112 = scmp.ne.s32.totalorder %s97, %s111
      %p113 = scmp.eq.s32.totalorder %s24, 0
      %p114 = por %p112, %p113
      %s116 = sadd.s32 %s115, 1
      %p119 = scmp.eq.s32.totalorder %s18, 1
      %p120 = scmp.ne.s32.totalorder %s115, %s117
      %p121 = scmp.eq.s32.totalorder %s18, 0
      %p122 = por %p120, %p121
      %p123 = scmp.ne.s32.totalorder %s115, %s117
      %p124 = scmp.eq.s32.totalorder %s23, 1
      %p125 = por %p123, %p124
      %p126 = scmp.ne.s32.totalorder %s117, %s118
      %p127 = scmp.eq.s32.totalorder %s23, 0
      %p128 = por %p126, %p127
      %p129 = scmp.ne.s32.totalorder %s117, %s118
      %p130 = scmp.eq.s32.totalorder %s24, 1
      %p131 = por %p129, %p130
      %p133 = scmp.ne.s32.totalorder %s118, %s132
      %p134 = scmp.eq.s32.totalorder %s24, 0
      %p135 = por %p133, %p134
      %s137 = sadd.s32 %s136, 1
      %p140 = scmp.eq.s32.totalorder %s18, 1
      %p141 = scmp.ne.s32.totalorder %s136, %s138
      %p142 = scmp.eq.s32.totalorder %s18, 0
      %p143 = por %p141, %p142
      %p144 = scmp.ne.s32.totalorder %s136, %s138
      %p145 = scmp.eq.s32.totalorder %s23, 1
      %p146 = por %p144, %p145
      %p147 = scmp.ne.s32.totalorder %s138, %s139
      %p148 = scmp.eq.s32.totalorder %s23, 0
      %p149 = por %p147, %p148
      %p150 = scmp.ne.s32.totalorder %s138, %s139
      %p151 = scmp.eq.s32.totalorder %s24, 1
      %p152 = por %p150, %p151
      %p154 = scmp.ne.s32.totalorder %s139, %s153
      %p155 = scmp.eq.s32.totalorder %s24, 0
      %p156 = por %p154, %p155
      %s158 = sadd.s32 %s157, 1
      %p161 = scmp.eq.s32.totalorder %s18, 1
      %p162 = scmp.ne.s32.totalorder %s157, %s159
      %p163 = scmp.eq.s32.totalorder %s18, 0
      %p164 = por %p162, %p163
      %p165 = scmp.ne.s32.totalorder %s157, %s159
      %p166 = scmp.eq.s32.totalorder %s23, 1
      %p167 = por %p165, %p166
      %p168 = scmp.ne.s32.totalorder %s159, %s160
      %p169 = scmp.eq.s32.totalorder %s23, 0
      %p170 = por %p168, %p169
      %p171 = scmp.ne.s32.totalorder %s159, %s160
      %p172 = scmp.eq.s32.totalorder %s24, 1
      %p173 = por %p171, %p172
      %p175 = scmp.ne.s32.totalorder %s160, %s174
      %p176 = scmp.eq.s32.totalorder %s24, 0
      %p177 = por %p175, %p176
      %s179 = sadd.s32 %s178, 1
      %p182 = scmp.eq.s32.totalorder %s18, 1
      %p183 = scmp.ne.s32.totalorder %s178, %s180
      %p184 = scmp.eq.s32.totalorder %s18, 0
      %p185 = por %p183, %p184
      %p186 = scmp.ne.s32.totalorder %s178, %s180
      %p187 = scmp.eq.s32.totalorder %s23, 1
      %p188 = por %p186, %p187
      %p189 = scmp.ne.s32.totalorder %s180, %s181
      %p190 = scmp.eq.s32.totalorder %s23, 0
      %p191 = por %p189, %p190
      %p192 = scmp.ne.s32.totalorder %s180, %s181
      %p193 = scmp.eq.s32.totalorder %s24, 1
      %p194 = por %p192, %p193
      %p196 = scmp.ne.s32.totalorder %s181, %s195
      %p197 = scmp.eq.s32.totalorder %s24, 0
      %p198 = por %p196, %p197
      %s200 = sadd.s32 %s199, 1
      %p203 = scmp.eq.s32.totalorder %s18, 1
      %p204 = scmp.ne.s32.totalorder %s199, %s201
      %p205 = scmp.eq.s32.totalorder %s18, 0
      %p206 = por %p204, %p205
      %p207 = scmp.ne.s32.totalorder %s199, %s201
      %p208 = scmp.eq.s32.totalorder %s23, 1
      %p209 = por %p207, %p208
      %p210 = scmp.ne.s32.totalorder %s201, %s202
      %p211 = scmp.eq.s32.totalorder %s23, 0
      %p212 = por %p210, %p211
      %p213 = scmp.ne.s32.totalorder %s201, %s202
      %p214 = scmp.eq.s32.totalorder %s24, 1
      %p215 = por %p213, %p214
      %p217 = scmp.ne.s32.totalorder %s202, %s216
      %p218 = scmp.eq.s32.totalorder %s24, 0
      %p219 = por %p217, %p218
      %s220 = ssub.s32 %s18, %s25
      %p221 = scmp.eq.s32.totalorder %s220, 0
      %s223 = sadd.s32 %s222, 1
      %s224 = scalar_select %p221, %s222, %s223
      %p227 = pneg %p221
      %p228 = scmp.eq.s32.totalorder %s18, 1
      %p229 = por %p227, %p228
      %p230 = scmp.ne.s32.totalorder %s222, %s225
      %p231 = scmp.eq.s32.totalorder %s18, 0
      %p232 = por %p230, %p231
      %p233 = scmp.ne.s32.totalorder %s222, %s225
      %p234 = scmp.eq.s32.totalorder %s23, 1
      %p235 = por %p233, %p234
      %p236 = scmp.ne.s32.totalorder %s225, %s226
      %p237 = scmp.eq.s32.totalorder %s23, 0
      %p238 = por %p236, %p237
      %p239 = scmp.ne.s32.totalorder %s225, %s226
      %p240 = scmp.eq.s32.totalorder %s24, 1
      %p241 = por %p239, %p240
      %p243 = scmp.ne.s32.totalorder %s226, %s242
      %p244 = scmp.eq.s32.totalorder %s24, 0
      %p245 = por %p243, %p244
      %p246 = scmp.le.s32.totalorder 1, %s18
      %p247 = scmp.lt.s32.totalorder %s18, 3
      %p248 = pnand %p246, %p247
      %p249 = pneg %p248
      // Predicated region
      $region9: #{flatten_module.1} parent=5 // pred_check
        _
      $region10: #{flatten_module.1} parent=5 // pred_check_branch
        %251 = sbr.rel (%p248) target = $region12
      $region11: #{flatten_module.1} parent=5 // pred_region
        %s252 = ssub.s32 %s18, 1
        // Predicated region
        $region13: #{flatten_module.1} parent=11 // pred_check
          %p253 = pneg %p65
        $region14: #{flatten_module.1} parent=11 // pred_check_branch
          %255 = sbr.rel (%p253) target = $region16
        $region15: #{flatten_module.1} parent=11 // pred_region
          _
        $region16: #{flatten_module.1} parent=11 // pred_fallthru
          _
        // Predicated region
        $region17: #{flatten_module.1} parent=11 // pred_check
          %p256 = pneg %p86
        $region18: #{flatten_module.1} parent=11 // pred_check_branch
          %258 = sbr.rel (%p256) target = $region20
        $region19: #{flatten_module.1} parent=11 // pred_region
          _
        $region20: #{flatten_module.1} parent=11 // pred_fallthru
          _
        // Predicated region
        $region21: #{flatten_module.1} parent=11 // pred_check
          %p259 = pneg %p107
        $region22: #{flatten_module.1} parent=11 // pred_check_branch
          %261 = sbr.rel (%p259) target = $region24
        $region23: #{flatten_module.1} parent=11 // pred_region
          _
        $region24: #{flatten_module.1} parent=11 // pred_fallthru
          _
        // Predicated region
        $region25: #{flatten_module.1} parent=11 // pred_check
          %p262 = pneg %p128
        $region26: #{flatten_module.1} parent=11 // pred_check_branch
          %264 = sbr.rel (%p262) target = $region28
        $region27: #{flatten_module.1} parent=11 // pred_region
          _
        $region28: #{flatten_module.1} parent=11 // pred_fallthru
          _
        // Predicated region
        $region29: #{flatten_module.1} parent=11 // pred_check
          %p265 = pneg %p149
        $region30: #{flatten_module.1} parent=11 // pred_check_branch
          %267 = sbr.rel (%p265) target = $region32
        $region31: #{flatten_module.1} parent=11 // pred_region
          _
        $region32: #{flatten_module.1} parent=11 // pred_fallthru
          _
        // Predicated region
        $region33: #{flatten_module.1} parent=11 // pred_check
          %p268 = pneg %p170
        $region34: #{flatten_module.1} parent=11 // pred_check_branch
          %270 = sbr.rel (%p268) target = $region36
        $region35: #{flatten_module.1} parent=11 // pred_region
          _
        $region36: #{flatten_module.1} parent=11 // pred_fallthru
          _
        // Predicated region
        $region37: #{flatten_module.1} parent=11 // pred_check
          %p271 = pneg %p191
        $region38: #{flatten_module.1} parent=11 // pred_check_branch
          %273 = sbr.rel (%p271) target = $region40
        $region39: #{flatten_module.1} parent=11 // pred_region
          _
        $region40: #{flatten_module.1} parent=11 // pred_fallthru
          _
        // Predicated region
        $region41: #{flatten_module.1} parent=11 // pred_check
          %p274 = pneg %p212
        $region42: #{flatten_module.1} parent=11 // pred_check_branch
          %276 = sbr.rel (%p274) target = $region44
        $region43: #{flatten_module.1} parent=11 // pred_region
          _
        $region44: #{flatten_module.1} parent=11 // pred_fallthru
          _
      $region12: #{flatten_module.1} parent=5 // pred_fallthru
        _
      %p277 = scmp.lt.s32.totalorder %s18, 2
      // Predicated region
      $region45: #{flatten_module.1} parent=5 // pred_check
        %p278 = pneg %p277
      $region46: #{flatten_module.1} parent=5 // pred_check_branch
        %280 = sbr.rel (%p278) target = $region48
      $region47: #{flatten_module.1} parent=5 // pred_region
        // Predicated region
        $region49: #{flatten_module.1} parent=47 // pred_check
          %p281 = pneg %p38
        $region50: #{flatten_module.1} parent=47 // pred_check_branch
          %283 = sbr.rel (%p281) target = $region52
        $region51: #{flatten_module.1} parent=47 // pred_region
          %p284 = scmp.lt.s32.totalorder %s18, 1
          %s285 = scalar_select %p284, %s18, 1
          %s286 = smul.addr %s285, 8
          %s287 = scalar_lea.vmem %s0, %s286
        $region52: #{flatten_module.1} parent=47 // pred_fallthru
          _
      $region48: #{flatten_module.1} parent=5 // pred_fallthru
        _
      %p288 = scmp.le.s32.totalorder 1, %s18
      %p289 = scmp.lt.s32.totalorder %s18, 3
      %p290 = pnand %p288, %p289
      %p291 = pneg %p290
      // Predicated region
      $region53: #{flatten_module.1} parent=5 // pred_check
        _
      $region54: #{flatten_module.1} parent=5 // pred_check_branch
        %293 = sbr.rel (%p290) target = $region56
      $region55: #{flatten_module.1} parent=5 // pred_region
        %s294 = ssub.s32 %s18, 1
        %p295 = scmp.lt.s32.totalorder %s23, 1
        %s296 = scalar_select %p295, %s23, 1
        %s297 = smul.addr %s296, 8
        %s298 = scalar_lea.vmem %s0, %s297
        %p299 = pneg %p44
        %p300 = pneg %p41
        %p301 = pneg %p65
        %p302 = pneg %p62
        %p303 = pneg %p86
        %p304 = pneg %p83
        %p305 = pneg %p107
        %p306 = pneg %p104
        %p307 = pneg %p128
        %p308 = pneg %p125
        %p309 = pneg %p149
        %p310 = pneg %p146
        %p311 = pneg %p170
        %p312 = pneg %p167
        %p313 = pneg %p191
        %p314 = pneg %p188
        %p315 = pneg %p212
        %p316 = pneg %p209
        %p317 = pneg %p238
        %p318 = pneg %p235
        %s319 = sand.u32 %s225, 1
        %s320 = scalar_lea.sflag [#allocation3], %s319
        %s321 = sand.u32 %s225, 1
        %s322 = scalar_lea.vmem [#allocation2], %s321
        %p323 = scmp.lt.s32.totalorder %s23, 1
        %s324 = scalar_select %p323, %s23, 1
        %s325 = smul.addr %s324, 8
        %s326 = scalar_lea.vmem %s0, %s325
        %v328 = vld [vmem:[%s326] sm:$0xff]
        %v330 = vlaneseq
        %v331 = vshrl.u32 %v330, 7
        %v332 = vsub.s32 0, %v331
        %v333 = vrot.slane %v328, %v332
        %v334 = vlaneseq
        %v335 = vshrl.u32 %v334, 7
        %v336 = vsub.s32 1, %v335
        %v337 = vrot.slane %v328, %v336
        %v338 = vlaneseq
        %v339 = vshrl.u32 %v338, 7
        %v340 = vsub.s32 2, %v339
        %v341 = vrot.slane %v328, %v340
        %v342 = vlaneseq
        %v343 = vshrl.u32 %v342, 7
        %v344 = vsub.s32 3, %v343
        %v345 = vrot.slane %v328, %v344
        %v346 = vlaneseq
        %v347 = vshrl.u32 %v346, 7
        %v348 = vsub.s32 4, %v347
        %v349 = vrot.slane %v328, %v348
        %v350 = vlaneseq
        %v351 = vshrl.u32 %v350, 7
        %v352 = vsub.s32 5, %v351
        %v353 = vrot.slane %v328, %v352
        %v354 = vlaneseq
        %v355 = vshrl.u32 %v354, 7
        %v356 = vsub.s32 6, %v355
        %v357 = vrot.slane %v328, %v356
        %v358 = vlaneseq
        %v359 = vshrl.u32 %v358, 7
        %v360 = vsub.s32 7, %v359
        %v361 = vrot.slane %v328, %v360
        %v370 = vpack.c.bf16 %v333, %v333
        %v371 = vpack.c.bf16 %v337, %v337
        %v372 = vpack.c.bf16 %v341, %v341
        %v373 = vpack.c.bf16 %v345, %v345
        %v374 = vpack.c.bf16 %v349, %v349
        %v375 = vpack.c.bf16 %v353, %v353
        %v376 = vpack.c.bf16 %v357, %v357
        %v377 = vpack.c.bf16 %v361, %v361
        %v378 = vld [vmem:[%s1] sm:$0xff]
        %v379 = vld [vmem:[%s1 + $0x8] sm:$0xff]
        %v380 = vld [vmem:[%s1 + $0x10] sm:$0xff]
        %v381 = vld [vmem:[%s1 + $0x18] sm:$0xff]
        %v382 = vld [vmem:[%s1 + $0x20] sm:$0xff]
        %v383 = vld [vmem:[%s1 + $0x28] sm:$0xff]
        %v384 = vld [vmem:[%s1 + $0x30] sm:$0xff]
        %v385 = vld [vmem:[%s1 + $0x38] sm:$0xff]
        %v386 = vld [vmem:[%s1 + $0x40] sm:$0xff]
        %v387 = vld [vmem:[%s1 + $0x48] sm:$0xff]
        %v388 = vld [vmem:[%s1 + $0x50] sm:$0xff]
        %v389 = vld [vmem:[%s1 + $0x58] sm:$0xff]
        %v390 = vld [vmem:[%s1 + $0x60] sm:$0xff]
        %v391 = vld [vmem:[%s1 + $0x68] sm:$0xff]
        %v392 = vld [vmem:[%s1 + $0x70] sm:$0xff]
        %v393 = vld [vmem:[%s1 + $0x78] sm:$0xff]
        %v394 = vld [vmem:[%s1 + $0x80] sm:$0xff]
        %v395 = vld [vmem:[%s1 + $0x88] sm:$0xff]
        %v396 = vld [vmem:[%s1 + $0x90] sm:$0xff]
        %v397 = vld [vmem:[%s1 + $0x98] sm:$0xff]
        %v398 = vld [vmem:[%s1 + $0xa0] sm:$0xff]
        %v399 = vld [vmem:[%s1 + $0xa8] sm:$0xff]
        %v400 = vld [vmem:[%s1 + $0xb0] sm:$0xff]
        %v401 = vld [vmem:[%s1 + $0xb8] sm:$0xff]
        %v402 = vld [vmem:[%s1 + $0xc0] sm:$0xff]
        %v403 = vld [vmem:[%s1 + $0xc8] sm:$0xff]
        %v404 = vld [vmem:[%s1 + $0xd0] sm:$0xff]
        %v405 = vld [vmem:[%s1 + $0xd8] sm:$0xff]
        %v406 = vld [vmem:[%s1 + $0xe0] sm:$0xff]
        %v407 = vld [vmem:[%s1 + $0xe8] sm:$0xff]
        %v408 = vld [vmem:[%s1 + $0xf0] sm:$0xff]
        %v409 = vld [vmem:[%s1 + $0xf8] sm:$0xff]
        %v410 = vld [vmem:[%s1 + $0x100] sm:$0xff]
        %v411 = vld [vmem:[%s1 + $0x108] sm:$0xff]
        %v412 = vld [vmem:[%s1 + $0x110] sm:$0xff]
        %v413 = vld [vmem:[%s1 + $0x118] sm:$0xff]
        %v414 = vld [vmem:[%s1 + $0x120] sm:$0xff]
        %v415 = vld [vmem:[%s1 + $0x128] sm:$0xff]
        %v416 = vld [vmem:[%s1 + $0x130] sm:$0xff]
        %v417 = vld [vmem:[%s1 + $0x138] sm:$0xff]
        %v418 = vld [vmem:[%s1 + $0x140] sm:$0xff]
        %v419 = vld [vmem:[%s1 + $0x148] sm:$0xff]
        %v420 = vld [vmem:[%s1 + $0x150] sm:$0xff]
        %v421 = vld [vmem:[%s1 + $0x158] sm:$0xff]
        %v422 = vld [vmem:[%s1 + $0x160] sm:$0xff]
        %v423 = vld [vmem:[%s1 + $0x168] sm:$0xff]
        %v424 = vld [vmem:[%s1 + $0x170] sm:$0xff]
        %v425 = vld [vmem:[%s1 + $0x178] sm:$0xff]
        %v426 = vld [vmem:[%s1 + $0x180] sm:$0xff]
        %v427 = vld [vmem:[%s1 + $0x188] sm:$0xff]
        %v428 = vld [vmem:[%s1 + $0x190] sm:$0xff]
        %v429 = vld [vmem:[%s1 + $0x198] sm:$0xff]
        %v430 = vld [vmem:[%s1 + $0x1a0] sm:$0xff]
        %v431 = vld [vmem:[%s1 + $0x1a8] sm:$0xff]
        %v432 = vld [vmem:[%s1 + $0x1b0] sm:$0xff]
        %v433 = vld [vmem:[%s1 + $0x1b8] sm:$0xff]
        %v434 = vld [vmem:[%s1 + $0x1c0] sm:$0xff]
        %v435 = vld [vmem:[%s1 + $0x1c8] sm:$0xff]
        %v436 = vld [vmem:[%s1 + $0x1d0] sm:$0xff]
        %v437 = vld [vmem:[%s1 + $0x1d8] sm:$0xff]
        %v438 = vld [vmem:[%s1 + $0x1e0] sm:$0xff]
        %v439 = vld [vmem:[%s1 + $0x1e8] sm:$0xff]
        %v440 = vld [vmem:[%s1 + $0x1f0] sm:$0xff]
        %v441 = vld [vmem:[%s1 + $0x1f8] sm:$0xff]
        %v442 = vld [vmem:[%s1 + $0x200] sm:$0xff]
        %v443 = vld [vmem:[%s1 + $0x208] sm:$0xff]
        %v444 = vld [vmem:[%s1 + $0x210] sm:$0xff]
        %v445 = vld [vmem:[%s1 + $0x218] sm:$0xff]
        %v446 = vld [vmem:[%s1 + $0x220] sm:$0xff]
        %v447 = vld [vmem:[%s1 + $0x228] sm:$0xff]
        %v448 = vld [vmem:[%s1 + $0x230] sm:$0xff]
        %v449 = vld [vmem:[%s1 + $0x238] sm:$0xff]
        %v450 = vld [vmem:[%s1 + $0x240] sm:$0xff]
        %v451 = vld [vmem:[%s1 + $0x248] sm:$0xff]
        %v452 = vld [vmem:[%s1 + $0x250] sm:$0xff]
        %v453 = vld [vmem:[%s1 + $0x258] sm:$0xff]
        %v454 = vld [vmem:[%s1 + $0x260] sm:$0xff]
        %v455 = vld [vmem:[%s1 + $0x268] sm:$0xff]
        %v456 = vld [vmem:[%s1 + $0x270] sm:$0xff]
        %v457 = vld [vmem:[%s1 + $0x278] sm:$0xff]
        %v458 = vld [vmem:[%s1 + $0x280] sm:$0xff]
        %v459 = vld [vmem:[%s1 + $0x288] sm:$0xff]
        %v460 = vld [vmem:[%s1 + $0x290] sm:$0xff]
        %v461 = vld [vmem:[%s1 + $0x298] sm:$0xff]
        %v462 = vld [vmem:[%s1 + $0x2a0] sm:$0xff]
        %v463 = vld [vmem:[%s1 + $0x2a8] sm:$0xff]
        %v464 = vld [vmem:[%s1 + $0x2b0] sm:$0xff]
        %v465 = vld [vmem:[%s1 + $0x2b8] sm:$0xff]
        %v466 = vld [vmem:[%s1 + $0x2c0] sm:$0xff]
        %v467 = vld [vmem:[%s1 + $0x2c8] sm:$0xff]
        %v468 = vld [vmem:[%s1 + $0x2d0] sm:$0xff]
        %v469 = vld [vmem:[%s1 + $0x2d8] sm:$0xff]
        %v470 = vld [vmem:[%s1 + $0x2e0] sm:$0xff]
        %v471 = vld [vmem:[%s1 + $0x2e8] sm:$0xff]
        %v472 = vld [vmem:[%s1 + $0x2f0] sm:$0xff]
        %v473 = vld [vmem:[%s1 + $0x2f8] sm:$0xff]
        %v474 = vld [vmem:[%s1 + $0x300] sm:$0xff]
        %v475 = vld [vmem:[%s1 + $0x308] sm:$0xff]
        %v476 = vld [vmem:[%s1 + $0x310] sm:$0xff]
        %v477 = vld [vmem:[%s1 + $0x318] sm:$0xff]
        %v478 = vld [vmem:[%s1 + $0x320] sm:$0xff]
        %v479 = vld [vmem:[%s1 + $0x328] sm:$0xff]
        %v480 = vld [vmem:[%s1 + $0x330] sm:$0xff]
        %v481 = vld [vmem:[%s1 + $0x338] sm:$0xff]
        %v482 = vld [vmem:[%s1 + $0x340] sm:$0xff]
        %v483 = vld [vmem:[%s1 + $0x348] sm:$0xff]
        %v484 = vld [vmem:[%s1 + $0x350] sm:$0xff]
        %v485 = vld [vmem:[%s1 + $0x358] sm:$0xff]
        %v486 = vld [vmem:[%s1 + $0x360] sm:$0xff]
        %v487 = vld [vmem:[%s1 + $0x368] sm:$0xff]
        %v488 = vld [vmem:[%s1 + $0x370] sm:$0xff]
        %v489 = vld [vmem:[%s1 + $0x378] sm:$0xff]
        %v490 = vld [vmem:[%s1 + $0x380] sm:$0xff]
        %v491 = vld [vmem:[%s1 + $0x388] sm:$0xff]
        %v492 = vld [vmem:[%s1 + $0x390] sm:$0xff]
        %v493 = vld [vmem:[%s1 + $0x398] sm:$0xff]
        %v494 = vld [vmem:[%s1 + $0x3a0] sm:$0xff]
        %v495 = vld [vmem:[%s1 + $0x3a8] sm:$0xff]
        %v496 = vld [vmem:[%s1 + $0x3b0] sm:$0xff]
        %v497 = vld [vmem:[%s1 + $0x3b8] sm:$0xff]
        %v498 = vld [vmem:[%s1 + $0x3c0] sm:$0xff]
        %v499 = vld [vmem:[%s1 + $0x3c8] sm:$0xff]
        %v500 = vld [vmem:[%s1 + $0x3d0] sm:$0xff]
        %v501 = vld [vmem:[%s1 + $0x3d8] sm:$0xff]
        %v502 = vld [vmem:[%s1 + $0x3e0] sm:$0xff]
        %v503 = vld [vmem:[%s1 + $0x3e8] sm:$0xff]
        %v504 = vld [vmem:[%s1 + $0x3f0] sm:$0xff]
        %v505 = vld [vmem:[%s1 + $0x3f8] sm:$0xff]
        %v506 = vld [vmem:[%s2] sm:$0x3]
        %v635 = vunpack.c.l.b16 %v378
        %v636 = vunpack.c.h.b16 %v378
        %v637 = vunpack.c.l.b16 %v379
        %v638 = vunpack.c.h.b16 %v379
        %v639 = vunpack.c.l.b16 %v380
        %v640 = vunpack.c.h.b16 %v380
        %v641 = vunpack.c.l.b16 %v381
        %v642 = vunpack.c.h.b16 %v381
        %v643 = vunpack.c.l.b16 %v382
        %v644 = vunpack.c.h.b16 %v382
        %v645 = vunpack.c.l.b16 %v383
        %v646 = vunpack.c.h.b16 %v383
        %v647 = vunpack.c.l.b16 %v384
        %v648 = vunpack.c.h.b16 %v384
        %v649 = vunpack.c.l.b16 %v385
        %v650 = vunpack.c.h.b16 %v385
        %v651 = vunpack.c.l.b16 %v386
        %v652 = vunpack.c.h.b16 %v386
        %v653 = vunpack.c.l.b16 %v387
        %v654 = vunpack.c.h.b16 %v387
        %v655 = vunpack.c.l.b16 %v388
        %v656 = vunpack.c.h.b16 %v388
        %v657 = vunpack.c.l.b16 %v389
        %v658 = vunpack.c.h.b16 %v389
        %v659 = vunpack.c.l.b16 %v390
        %v660 = vunpack.c.h.b16 %v390
        %v661 = vunpack.c.l.b16 %v391
        %v662 = vunpack.c.h.b16 %v391
        %v663 = vunpack.c.l.b16 %v392
        %v664 = vunpack.c.h.b16 %v392
        %v665 = vunpack.c.l.b16 %v393
        %v666 = vunpack.c.h.b16 %v393
        %v667 = vunpack.c.l.b16 %v394
        %v668 = vunpack.c.h.b16 %v394
        %v669 = vunpack.c.l.b16 %v395
        %v670 = vunpack.c.h.b16 %v395
        %v671 = vunpack.c.l.b16 %v396
        %v672 = vunpack.c.h.b16 %v396
        %v673 = vunpack.c.l.b16 %v397
        %v674 = vunpack.c.h.b16 %v397
        %v675 = vunpack.c.l.b16 %v398
        %v676 = vunpack.c.h.b16 %v398
        %v677 = vunpack.c.l.b16 %v399
        %v678 = vunpack.c.h.b16 %v399
        %v679 = vunpack.c.l.b16 %v400
        %v680 = vunpack.c.h.b16 %v400
        %v681 = vunpack.c.l.b16 %v401
        %v682 = vunpack.c.h.b16 %v401
        %v683 = vunpack.c.l.b16 %v402
        %v684 = vunpack.c.h.b16 %v402
        %v685 = vunpack.c.l.b16 %v403
        %v686 = vunpack.c.h.b16 %v403
        %v687 = vunpack.c.l.b16 %v404
        %v688 = vunpack.c.h.b16 %v404
        %v689 = vunpack.c.l.b16 %v405
        %v690 = vunpack.c.h.b16 %v405
        %v691 = vunpack.c.l.b16 %v406
        %v692 = vunpack.c.h.b16 %v406
        %v693 = vunpack.c.l.b16 %v407
        %v694 = vunpack.c.h.b16 %v407
        %v695 = vunpack.c.l.b16 %v408
        %v696 = vunpack.c.h.b16 %v408
        %v697 = vunpack.c.l.b16 %v409
        %v698 = vunpack.c.h.b16 %v409
        %v699 = vunpack.c.l.b16 %v410
        %v700 = vunpack.c.h.b16 %v410
        %v701 = vunpack.c.l.b16 %v411
        %v702 = vunpack.c.h.b16 %v411
        %v703 = vunpack.c.l.b16 %v412
        %v704 = vunpack.c.h.b16 %v412
        %v705 = vunpack.c.l.b16 %v413
        %v706 = vunpack.c.h.b16 %v413
        %v707 = vunpack.c.l.b16 %v414
        %v708 = vunpack.c.h.b16 %v414
        %v709 = vunpack.c.l.b16 %v415
        %v710 = vunpack.c.h.b16 %v415
        %v711 = vunpack.c.l.b16 %v416
        %v712 = vunpack.c.h.b16 %v416
        %v713 = vunpack.c.l.b16 %v417
        %v714 = vunpack.c.h.b16 %v417
        %v715 = vunpack.c.l.b16 %v418
        %v716 = vunpack.c.h.b16 %v418
        %v717 = vunpack.c.l.b16 %v419
        %v718 = vunpack.c.h.b16 %v419
        %v719 = vunpack.c.l.b16 %v420
        %v720 = vunpack.c.h.b16 %v420
        %v721 = vunpack.c.l.b16 %v421
        %v722 = vunpack.c.h.b16 %v421
        %v723 = vunpack.c.l.b16 %v422
        %v724 = vunpack.c.h.b16 %v422
        %v725 = vunpack.c.l.b16 %v423
        %v726 = vunpack.c.h.b16 %v423
        %v727 = vunpack.c.l.b16 %v424
        %v728 = vunpack.c.h.b16 %v424
        %v729 = vunpack.c.l.b16 %v425
        %v730 = vunpack.c.h.b16 %v425
        %v731 = vunpack.c.l.b16 %v426
        %v732 = vunpack.c.h.b16 %v426
        %v733 = vunpack.c.l.b16 %v427
        %v734 = vunpack.c.h.b16 %v427
        %v735 = vunpack.c.l.b16 %v428
        %v736 = vunpack.c.h.b16 %v428
        %v737 = vunpack.c.l.b16 %v429
        %v738 = vunpack.c.h.b16 %v429
        %v739 = vunpack.c.l.b16 %v430
        %v740 = vunpack.c.h.b16 %v430
        %v741 = vunpack.c.l.b16 %v431
        %v742 = vunpack.c.h.b16 %v431
        %v743 = vunpack.c.l.b16 %v432
        %v744 = vunpack.c.h.b16 %v432
        %v745 = vunpack.c.l.b16 %v433
        %v746 = vunpack.c.h.b16 %v433
        %v747 = vunpack.c.l.b16 %v434
        %v748 = vunpack.c.h.b16 %v434
        %v749 = vunpack.c.l.b16 %v435
        %v750 = vunpack.c.h.b16 %v435
        %v751 = vunpack.c.l.b16 %v436
        %v752 = vunpack.c.h.b16 %v436
        %v753 = vunpack.c.l.b16 %v437
        %v754 = vunpack.c.h.b16 %v437
        %v755 = vunpack.c.l.b16 %v438
        %v756 = vunpack.c.h.b16 %v438
        %v757 = vunpack.c.l.b16 %v439
        %v758 = vunpack.c.h.b16 %v439
        %v759 = vunpack.c.l.b16 %v440
        %v760 = vunpack.c.h.b16 %v440
        %v761 = vunpack.c.l.b16 %v441
        %v762 = vunpack.c.h.b16 %v441
        %v763 = vunpack.c.l.b16 %v442
        %v764 = vunpack.c.h.b16 %v442
        %v765 = vunpack.c.l.b16 %v443
        %v766 = vunpack.c.h.b16 %v443
        %v767 = vunpack.c.l.b16 %v444
        %v768 = vunpack.c.h.b16 %v444
        %v769 = vunpack.c.l.b16 %v445
        %v770 = vunpack.c.h.b16 %v445
        %v771 = vunpack.c.l.b16 %v446
        %v772 = vunpack.c.h.b16 %v446
        %v773 = vunpack.c.l.b16 %v447
        %v774 = vunpack.c.h.b16 %v447
        %v775 = vunpack.c.l.b16 %v448
        %v776 = vunpack.c.h.b16 %v448
        %v777 = vunpack.c.l.b16 %v449
        %v778 = vunpack.c.h.b16 %v449
        %v779 = vunpack.c.l.b16 %v450
        %v780 = vunpack.c.h.b16 %v450
        %v781 = vunpack.c.l.b16 %v451
        %v782 = vunpack.c.h.b16 %v451
        %v783 = vunpack.c.l.b16 %v452
        %v784 = vunpack.c.h.b16 %v452
        %v785 = vunpack.c.l.b16 %v453
        %v786 = vunpack.c.h.b16 %v453
        %v787 = vunpack.c.l.b16 %v454
        %v788 = vunpack.c.h.b16 %v454
        %v789 = vunpack.c.l.b16 %v455
        %v790 = vunpack.c.h.b16 %v455
        %v791 = vunpack.c.l.b16 %v456
        %v792 = vunpack.c.h.b16 %v456
        %v793 = vunpack.c.l.b16 %v457
        %v794 = vunpack.c.h.b16 %v457
        %v795 = vunpack.c.l.b16 %v458
        %v796 = vunpack.c.h.b16 %v458
        %v797 = vunpack.c.l.b16 %v459
        %v798 = vunpack.c.h.b16 %v459
        %v799 = vunpack.c.l.b16 %v460
        %v800 = vunpack.c.h.b16 %v460
        %v801 = vunpack.c.l.b16 %v461
        %v802 = vunpack.c.h.b16 %v461
        %v803 = vunpack.c.l.b16 %v462
        %v804 = vunpack.c.h.b16 %v462
        %v805 = vunpack.c.l.b16 %v463
        %v806 = vunpack.c.h.b16 %v463
        %v807 = vunpack.c.l.b16 %v464
        %v808 = vunpack.c.h.b16 %v464
        %v809 = vunpack.c.l.b16 %v465
        %v810 = vunpack.c.h.b16 %v465
        %v811 = vunpack.c.l.b16 %v466
        %v812 = vunpack.c.h.b16 %v466
        %v813 = vunpack.c.l.b16 %v467
        %v814 = vunpack.c.h.b16 %v467
        %v815 = vunpack.c.l.b16 %v468
        %v816 = vunpack.c.h.b16 %v468
        %v817 = vunpack.c.l.b16 %v469
        %v818 = vunpack.c.h.b16 %v469
        %v819 = vunpack.c.l.b16 %v470
        %v820 = vunpack.c.h.b16 %v470
        %v821 = vunpack.c.l.b16 %v471
        %v822 = vunpack.c.h.b16 %v471
        %v823 = vunpack.c.l.b16 %v472
        %v824 = vunpack.c.h.b16 %v472
        %v825 = vunpack.c.l.b16 %v473
        %v826 = vunpack.c.h.b16 %v473
        %v827 = vunpack.c.l.b16 %v474
        %v828 = vunpack.c.h.b16 %v474
        %v829 = vunpack.c.l.b16 %v475
        %v830 = vunpack.c.h.b16 %v475
        %v831 = vunpack.c.l.b16 %v476
        %v832 = vunpack.c.h.b16 %v476
        %v833 = vunpack.c.l.b16 %v477
        %v834 = vunpack.c.h.b16 %v477
        %v835 = vunpack.c.l.b16 %v478
        %v836 = vunpack.c.h.b16 %v478
        %v837 = vunpack.c.l.b16 %v479
        %v838 = vunpack.c.h.b16 %v479
        %v839 = vunpack.c.l.b16 %v480
        %v840 = vunpack.c.h.b16 %v480
        %v841 = vunpack.c.l.b16 %v481
        %v842 = vunpack.c.h.b16 %v481
        %v843 = vunpack.c.l.b16 %v482
        %v844 = vunpack.c.h.b16 %v482
        %v845 = vunpack.c.l.b16 %v483
        %v846 = vunpack.c.h.b16 %v483
        %v847 = vunpack.c.l.b16 %v484
        %v848 = vunpack.c.h.b16 %v484
        %v849 = vunpack.c.l.b16 %v485
        %v850 = vunpack.c.h.b16 %v485
        %v851 = vunpack.c.l.b16 %v486
        %v852 = vunpack.c.h.b16 %v486
        %v853 = vunpack.c.l.b16 %v487
        %v854 = vunpack.c.h.b16 %v487
        %v855 = vunpack.c.l.b16 %v488
        %v856 = vunpack.c.h.b16 %v488
        %v857 = vunpack.c.l.b16 %v489
        %v858 = vunpack.c.h.b16 %v489
        %v859 = vunpack.c.l.b16 %v490
        %v860 = vunpack.c.h.b16 %v490
        %v861 = vunpack.c.l.b16 %v491
        %v862 = vunpack.c.h.b16 %v491
        %v863 = vunpack.c.l.b16 %v492
        %v864 = vunpack.c.h.b16 %v492
        %v865 = vunpack.c.l.b16 %v493
        %v866 = vunpack.c.h.b16 %v493
        %v867 = vunpack.c.l.b16 %v494
        %v868 = vunpack.c.h.b16 %v494
        %v869 = vunpack.c.l.b16 %v495
        %v870 = vunpack.c.h.b16 %v495
        %v871 = vunpack.c.l.b16 %v496
        %v872 = vunpack.c.h.b16 %v496
        %v873 = vunpack.c.l.b16 %v497
        %v874 = vunpack.c.h.b16 %v497
        %v875 = vunpack.c.l.b16 %v498
        %v876 = vunpack.c.h.b16 %v498
        %v877 = vunpack.c.l.b16 %v499
        %v878 = vunpack.c.h.b16 %v499
        %v879 = vunpack.c.l.b16 %v500
        %v880 = vunpack.c.h.b16 %v500
        %v881 = vunpack.c.l.b16 %v501
        %v882 = vunpack.c.h.b16 %v501
        %v883 = vunpack.c.l.b16 %v502
        %v884 = vunpack.c.h.b16 %v502
        %v885 = vunpack.c.l.b16 %v503
        %v886 = vunpack.c.h.b16 %v503
        %v887 = vunpack.c.l.b16 %v504
        %v888 = vunpack.c.h.b16 %v504
        %v889 = vunpack.c.l.b16 %v505
        %v890 = vunpack.c.h.b16 %v505
        %v891 = vpack.c.b16 %v637, %v635
        %v892 = vpack.c.b16 %v638, %v636
        %v893 = vpack.c.b16 %v641, %v639
        %v894 = vpack.c.b16 %v642, %v640
        %v895 = vpack.c.b16 %v645, %v643
        %v896 = vpack.c.b16 %v646, %v644
        %v897 = vpack.c.b16 %v649, %v647
        %v898 = vpack.c.b16 %v650, %v648
        %v899 = vpack.c.b16 %v653, %v651
        %v900 = vpack.c.b16 %v654, %v652
        %v901 = vpack.c.b16 %v657, %v655
        %v902 = vpack.c.b16 %v658, %v656
        %v903 = vpack.c.b16 %v661, %v659
        %v904 = vpack.c.b16 %v662, %v660
        %v905 = vpack.c.b16 %v665, %v663
        %v906 = vpack.c.b16 %v666, %v664
        %v907 = vpack.c.b16 %v669, %v667
        %v908 = vpack.c.b16 %v670, %v668
        %v909 = vpack.c.b16 %v673, %v671
        %v910 = vpack.c.b16 %v674, %v672
        %v911 = vpack.c.b16 %v677, %v675
        %v912 = vpack.c.b16 %v678, %v676
        %v913 = vpack.c.b16 %v681, %v679
        %v914 = vpack.c.b16 %v682, %v680
        %v915 = vpack.c.b16 %v685, %v683
        %v916 = vpack.c.b16 %v686, %v684
        %v917 = vpack.c.b16 %v689, %v687
        %v918 = vpack.c.b16 %v690, %v688
        %v919 = vpack.c.b16 %v693, %v691
        %v920 = vpack.c.b16 %v694, %v692
        %v921 = vpack.c.b16 %v697, %v695
        %v922 = vpack.c.b16 %v698, %v696
        %v923 = vpack.c.b16 %v701, %v699
        %v924 = vpack.c.b16 %v702, %v700
        %v925 = vpack.c.b16 %v705, %v703
        %v926 = vpack.c.b16 %v706, %v704
        %v927 = vpack.c.b16 %v709, %v707
        %v928 = vpack.c.b16 %v710, %v708
        %v929 = vpack.c.b16 %v713, %v711
        %v930 = vpack.c.b16 %v714, %v712
        %v931 = vpack.c.b16 %v717, %v715
        %v932 = vpack.c.b16 %v718, %v716
        %v933 = vpack.c.b16 %v721, %v719
        %v934 = vpack.c.b16 %v722, %v720
        %v935 = vpack.c.b16 %v725, %v723
        %v936 = vpack.c.b16 %v726, %v724
        %v937 = vpack.c.b16 %v729, %v727
        %v938 = vpack.c.b16 %v730, %v728
        %v939 = vpack.c.b16 %v733, %v731
        %v940 = vpack.c.b16 %v734, %v732
        %v941 = vpack.c.b16 %v737, %v735
        %v942 = vpack.c.b16 %v738, %v736
        %v943 = vpack.c.b16 %v741, %v739
        %v944 = vpack.c.b16 %v742, %v740
        %v945 = vpack.c.b16 %v745, %v743
        %v946 = vpack.c.b16 %v746, %v744
        %v947 = vpack.c.b16 %v749, %v747
        %v948 = vpack.c.b16 %v750, %v748
        %v949 = vpack.c.b16 %v753, %v751
        %v950 = vpack.c.b16 %v754, %v752
        %v951 = vpack.c.b16 %v757, %v755
        %v952 = vpack.c.b16 %v758, %v756
        %v953 = vpack.c.b16 %v761, %v759
        %v954 = vpack.c.b16 %v762, %v760
        %v955 = vpack.c.b16 %v765, %v763
        %v956 = vpack.c.b16 %v766, %v764
        %v957 = vpack.c.b16 %v769, %v767
        %v958 = vpack.c.b16 %v770, %v768
        %v959 = vpack.c.b16 %v773, %v771
        %v960 = vpack.c.b16 %v774, %v772
        %v961 = vpack.c.b16 %v777, %v775
        %v962 = vpack.c.b16 %v778, %v776
        %v963 = vpack.c.b16 %v781, %v779
        %v964 = vpack.c.b16 %v782, %v780
        %v965 = vpack.c.b16 %v785, %v783
        %v966 = vpack.c.b16 %v786, %v784
        %v967 = vpack.c.b16 %v789, %v787
        %v968 = vpack.c.b16 %v790, %v788
        %v969 = vpack.c.b16 %v793, %v791
        %v970 = vpack.c.b16 %v794, %v792
        %v971 = vpack.c.b16 %v797, %v795
        %v972 = vpack.c.b16 %v798, %v796
        %v973 = vpack.c.b16 %v801, %v799
        %v974 = vpack.c.b16 %v802, %v800
        %v975 = vpack.c.b16 %v805, %v803
        %v976 = vpack.c.b16 %v806, %v804
        %v977 = vpack.c.b16 %v809, %v807
        %v978 = vpack.c.b16 %v810, %v808
        %v979 = vpack.c.b16 %v813, %v811
        %v980 = vpack.c.b16 %v814, %v812
        %v981 = vpack.c.b16 %v817, %v815
        %v982 = vpack.c.b16 %v818, %v816
        %v983 = vpack.c.b16 %v821, %v819
        %v984 = vpack.c.b16 %v822, %v820
        %v985 = vpack.c.b16 %v825, %v823
        %v986 = vpack.c.b16 %v826, %v824
        %v987 = vpack.c.b16 %v829, %v827
        %v988 = vpack.c.b16 %v830, %v828
        %v989 = vpack.c.b16 %v833, %v831
        %v990 = vpack.c.b16 %v834, %v832
        %v991 = vpack.c.b16 %v837, %v835
        %v992 = vpack.c.b16 %v838, %v836
        %v993 = vpack.c.b16 %v841, %v839
        %v994 = vpack.c.b16 %v842, %v840
        %v995 = vpack.c.b16 %v845, %v843
        %v996 = vpack.c.b16 %v846, %v844
        %v997 = vpack.c.b16 %v849, %v847
        %v998 = vpack.c.b16 %v850, %v848
        %v999 = vpack.c.b16 %v853, %v851
        %v1000 = vpack.c.b16 %v854, %v852
        %v1001 = vpack.c.b16 %v857, %v855
        %v1002 = vpack.c.b16 %v858, %v856
        %v1003 = vpack.c.b16 %v861, %v859
        %v1004 = vpack.c.b16 %v862, %v860
        %v1005 = vpack.c.b16 %v865, %v863
        %v1006 = vpack.c.b16 %v866, %v864
        %v1007 = vpack.c.b16 %v869, %v867
        %v1008 = vpack.c.b16 %v870, %v868
        %v1009 = vpack.c.b16 %v873, %v871
        %v1010 = vpack.c.b16 %v874, %v872
        %v1011 = vpack.c.b16 %v877, %v875
        %v1012 = vpack.c.b16 %v878, %v876
        %v1013 = vpack.c.b16 %v881, %v879
        %v1014 = vpack.c.b16 %v882, %v880
        %v1015 = vpack.c.b16 %v885, %v883
        %v1016 = vpack.c.b16 %v886, %v884
        %v1017 = vpack.c.b16 %v889, %v887
        %v1018 = vpack.c.b16 %v890, %v888
        %v1148 = vlaneseq
        %v1149 = vshrl.u32 %v1148, 7
        %v1150 = vsub.s32 0, %v1149
        %v1151 = vrot.slane %v506, %v1150
        %v1152 = vlaneseq
        %v1153 = vshrl.u32 %v1152, 7
        %v1154 = vsub.s32 1, %v1153
        %v1155 = vrot.slane %v506, %v1154
        %1158 = vmatprep.subr.bf16.mxu0 %v906
        %1159 = vmatpush1.bf16.msra.mxu0 %v905
        %1160 = vmatprep.subr.bf16.mxu0 %v904
        %1161 = vmatpush1.bf16.msra.mxu0 %v903
        %1162 = vmatprep.subr.bf16.mxu0 %v902
        %1163 = vmatpush1.bf16.msra.mxu0 %v901
        %1164 = vmatprep.subr.bf16.mxu0 %v900
        %1165 = vmatpush1.bf16.msra.mxu0 %v899
        %1166 = vmatprep.subr.bf16.mxu0 %v898
        %1167 = vmatpush1.bf16.msra.mxu0 %v897
        %1168 = vmatprep.subr.bf16.mxu0 %v896
        %1169 = vmatpush1.bf16.msra.mxu0 %v895
        %1170 = vmatprep.subr.bf16.mxu0 %v894
        %1171 = vmatpush1.bf16.msra.mxu0 %v893
        %1172 = vmatprep.subr.bf16.mxu0 %v892
        %1173 = vmatpush1.bf16.msra.mxu0 %v891
        %1174 = vmatprep.subr.bf16.mxu0 %v922
        %1175 = vmatpush2.bf16.msra.mxu0 %v921
        %1176 = vmatprep.subr.bf16.mxu0 %v920
        %1177 = vmatpush2.bf16.msra.mxu0 %v919
        %1178 = vmatprep.subr.bf16.mxu0 %v918
        %1179 = vmatpush2.bf16.msra.mxu0 %v917
        %1180 = vmatprep.subr.bf16.mxu0 %v916
        %1181 = vmatpush2.bf16.msra.mxu0 %v915
        %1182 = vmatprep.subr.bf16.mxu0 %v914
        %1183 = vmatpush2.bf16.msra.mxu0 %v913
        %1184 = vmatprep.subr.bf16.mxu0 %v912
        %1185 = vmatpush2.bf16.msra.mxu0 %v911
        %1186 = vmatprep.subr.bf16.mxu0 %v910
        %1187 = vmatpush2.bf16.msra.mxu0 %v909
        %1188 = vmatprep.subr.bf16.mxu0 %v908
        %1189 = vmatpush2.bf16.msra.mxu0 %v907
        %1190 = vmatprep.mubr.bf16.mxu0 %v371
        %1191 = vmatmul.mubr.bf16.gmra.mxu0 %v370
        %v1192 = vpop.f32.mrf.mxu0
        %v1193 = vadd.f32 %v1151, %v1192
        %v1194 = vpop.f32.mrf.mxu0
        %v1195 = vadd.f32 %v1155, %v1194
        %v1196 = vpop.f32.mrf.mxu0
        %v1197 = vpop.f32.mrf.mxu0
        %1198 = vdwg.mxu0
        %1199 = vmatprep.subr.bf16.mxu0 %v938
        %1200 = vmatpush1.bf16.msra.mxu0 %v937
        %1201 = vmatprep.subr.bf16.mxu0 %v936
        %1202 = vmatpush1.bf16.msra.mxu0 %v935
        %1203 = vmatprep.subr.bf16.mxu0 %v934
        %1204 = vmatpush1.bf16.msra.mxu0 %v933
        %1205 = vmatprep.subr.bf16.mxu0 %v932
        %1206 = vmatpush1.bf16.msra.mxu0 %v931
        %1207 = vmatprep.subr.bf16.mxu0 %v930
        %1208 = vmatpush1.bf16.msra.mxu0 %v929
        %1209 = vmatprep.subr.bf16.mxu0 %v928
        %1210 = vmatpush1.bf16.msra.mxu0 %v927
        %1211 = vmatprep.subr.bf16.mxu0 %v926
        %1212 = vmatpush1.bf16.msra.mxu0 %v925
        %1213 = vmatprep.subr.bf16.mxu0 %v924
        %1214 = vmatpush1.bf16.msra.mxu0 %v923
        %1215 = vmatprep.subr.bf16.mxu0 %v954
        %1216 = vmatpush2.bf16.msra.mxu0 %v953
        %1217 = vmatprep.subr.bf16.mxu0 %v952
        %1218 = vmatpush2.bf16.msra.mxu0 %v951
        %1219 = vmatprep.subr.bf16.mxu0 %v950
        %1220 = vmatpush2.bf16.msra.mxu0 %v949
        %1221 = vmatprep.subr.bf16.mxu0 %v948
        %1222 = vmatpush2.bf16.msra.mxu0 %v947
        %1223 = vmatprep.subr.bf16.mxu0 %v946
        %1224 = vmatpush2.bf16.msra.mxu0 %v945
        %1225 = vmatprep.subr.bf16.mxu0 %v944
        %1226 = vmatpush2.bf16.msra.mxu0 %v943
        %1227 = vmatprep.subr.bf16.mxu0 %v942
        %1228 = vmatpush2.bf16.msra.mxu0 %v941
        %1229 = vmatprep.subr.bf16.mxu0 %v940
        %1230 = vmatpush2.bf16.msra.mxu0 %v939
        %1231 = vmatprep.mubr.bf16.mxu0 %v373
        %1232 = vmatmul.mubr.bf16.gmra.mxu0 %v372
        %v1233 = vpop.f32.mrf.mxu0
        %v1234 = vadd.f32 %v1193, %v1233
        %v1235 = vpop.f32.mrf.mxu0
        %v1236 = vadd.f32 %v1195, %v1235
        %v1237 = vpop.f32.mrf.mxu0
        %v1238 = vpop.f32.mrf.mxu0
        %1239 = vdwg.mxu0
        %1240 = vmatprep.subr.bf16.mxu0 %v970
        %1241 = vmatpush1.bf16.msra.mxu0 %v969
        %1242 = vmatprep.subr.bf16.mxu0 %v968
        %1243 = vmatpush1.bf16.msra.mxu0 %v967
        %1244 = vmatprep.subr.bf16.mxu0 %v966
        %1245 = vmatpush1.bf16.msra.mxu0 %v965
        %1246 = vmatprep.subr.bf16.mxu0 %v964
        %1247 = vmatpush1.bf16.msra.mxu0 %v963
        %1248 = vmatprep.subr.bf16.mxu0 %v962
        %1249 = vmatpush1.bf16.msra.mxu0 %v961
        %1250 = vmatprep.subr.bf16.mxu0 %v960
        %1251 = vmatpush1.bf16.msra.mxu0 %v959
        %1252 = vmatprep.subr.bf16.mxu0 %v958
        %1253 = vmatpush1.bf16.msra.mxu0 %v957
        %1254 = vmatprep.subr.bf16.mxu0 %v956
        %1255 = vmatpush1.bf16.msra.mxu0 %v955
        %1256 = vmatprep.subr.bf16.mxu0 %v986
        %1257 = vmatpush2.bf16.msra.mxu0 %v985
        %1258 = vmatprep.subr.bf16.mxu0 %v984
        %1259 = vmatpush2.bf16.msra.mxu0 %v983
        %1260 = vmatprep.subr.bf16.mxu0 %v982
        %1261 = vmatpush2.bf16.msra.mxu0 %v981
        %1262 = vmatprep.subr.bf16.mxu0 %v980
        %1263 = vmatpush2.bf16.msra.mxu0 %v979
        %1264 = vmatprep.subr.bf16.mxu0 %v978
        %1265 = vmatpush2.bf16.msra.mxu0 %v977
        %1266 = vmatprep.subr.bf16.mxu0 %v976
        %1267 = vmatpush2.bf16.msra.mxu0 %v975
        %1268 = vmatprep.subr.bf16.mxu0 %v974
        %1269 = vmatpush2.bf16.msra.mxu0 %v973
        %1270 = vmatprep.subr.bf16.mxu0 %v972
        %1271 = vmatpush2.bf16.msra.mxu0 %v971
        %1272 = vmatprep.mubr.bf16.mxu0 %v375
        %1273 = vmatmul.mubr.bf16.gmra.mxu0 %v374
        %v1274 = vpop.f32.mrf.mxu0
        %v1275 = vadd.f32 %v1234, %v1274
        %v1276 = vpop.f32.mrf.mxu0
        %v1277 = vadd.f32 %v1236, %v1276
        %v1278 = vpop.f32.mrf.mxu0
        %v1279 = vpop.f32.mrf.mxu0
        %1280 = vdwg.mxu0
        %1281 = vmatprep.subr.bf16.mxu0 %v1002
        %1282 = vmatpush1.bf16.msra.mxu0 %v1001
        %1283 = vmatprep.subr.bf16.mxu0 %v1000
        %1284 = vmatpush1.bf16.msra.mxu0 %v999
        %1285 = vmatprep.subr.bf16.mxu0 %v998
        %1286 = vmatpush1.bf16.msra.mxu0 %v997
        %1287 = vmatprep.subr.bf16.mxu0 %v996
        %1288 = vmatpush1.bf16.msra.mxu0 %v995
        %1289 = vmatprep.subr.bf16.mxu0 %v994
        %1290 = vmatpush1.bf16.msra.mxu0 %v993
        %1291 = vmatprep.subr.bf16.mxu0 %v992
        %1292 = vmatpush1.bf16.msra.mxu0 %v991
        %1293 = vmatprep.subr.bf16.mxu0 %v990
        %1294 = vmatpush1.bf16.msra.mxu0 %v989
        %1295 = vmatprep.subr.bf16.mxu0 %v988
        %1296 = vmatpush1.bf16.msra.mxu0 %v987
        %1297 = vmatprep.subr.bf16.mxu0 %v1018
        %1298 = vmatpush2.bf16.msra.mxu0 %v1017
        %1299 = vmatprep.subr.bf16.mxu0 %v1016
        %1300 = vmatpush2.bf16.msra.mxu0 %v1015
        %1301 = vmatprep.subr.bf16.mxu0 %v1014
        %1302 = vmatpush2.bf16.msra.mxu0 %v1013
        %1303 = vmatprep.subr.bf16.mxu0 %v1012
        %1304 = vmatpush2.bf16.msra.mxu0 %v1011
        %1305 = vmatprep.subr.bf16.mxu0 %v1010
        %1306 = vmatpush2.bf16.msra.mxu0 %v1009
        %1307 = vmatprep.subr.bf16.mxu0 %v1008
        %1308 = vmatpush2.bf16.msra.mxu0 %v1007
        %1309 = vmatprep.subr.bf16.mxu0 %v1006
        %1310 = vmatpush2.bf16.msra.mxu0 %v1005
        %1311 = vmatprep.subr.bf16.mxu0 %v1004
        %1312 = vmatpush2.bf16.msra.mxu0 %v1003
        %1313 = vmatprep.mubr.bf16.mxu0 %v377
        %1314 = vmatmul.mubr.bf16.gmra.mxu0 %v376
        %v1315 = vpop.f32.mrf.mxu0
        %v1316 = vadd.f32 %v1275, %v1315
        %v1317 = vpop.f32.mrf.mxu0
        %v1318 = vadd.f32 %v1277, %v1317
        %v1319 = vpop.f32.mrf.mxu0
        %v1320 = vpop.f32.mrf.mxu0
        %1321 = vdwg.mxu0
        %v1322 = vmul.f32 %v1316, 0.01
        %v1323 = vmul.f32 %v1318, 0.01
        %v1324 = vmax.f32 %v1316, %v1322
        %v1325 = vmax.f32 %v1318, %v1323
        %v1326 = vpack.c.bf16 %v1324, %v1324
        %v1327 = vpack.c.bf16 %v1325, %v1325
        %v1328 = vld [vmem:[%s3] sm:$0xf]
        %v1329 = vld [vmem:[%s3 + $0x4] sm:$0xf]
        %v1330 = vld [vmem:[%s3 + $0x8] sm:$0xf]
        %v1331 = vld [vmem:[%s3 + $0xc] sm:$0xf]
        %v1332 = vld [vmem:[%s3 + $0x10] sm:$0xf]
        %v1333 = vld [vmem:[%s3 + $0x14] sm:$0xf]
        %v1334 = vld [vmem:[%s3 + $0x18] sm:$0xf]
        %v1335 = vld [vmem:[%s3 + $0x1c] sm:$0xf]
        %v1336 = vld [vmem:[%s3 + $0x20] sm:$0xf]
        %v1337 = vld [vmem:[%s3 + $0x24] sm:$0xf]
        %v1338 = vld [vmem:[%s3 + $0x28] sm:$0xf]
        %v1339 = vld [vmem:[%s3 + $0x2c] sm:$0xf]
        %v1340 = vld [vmem:[%s3 + $0x30] sm:$0xf]
        %v1341 = vld [vmem:[%s3 + $0x34] sm:$0xf]
        %v1342 = vld [vmem:[%s3 + $0x38] sm:$0xf]
        %v1343 = vld [vmem:[%s3 + $0x3c] sm:$0xf]
        %v1344 = vld [vmem:[%s3 + $0x40] sm:$0xf]
        %v1345 = vld [vmem:[%s3 + $0x44] sm:$0xf]
        %v1346 = vld [vmem:[%s3 + $0x48] sm:$0xf]
        %v1347 = vld [vmem:[%s3 + $0x4c] sm:$0xf]
        %v1348 = vld [vmem:[%s3 + $0x50] sm:$0xf]
        %v1349 = vld [vmem:[%s3 + $0x54] sm:$0xf]
        %v1350 = vld [vmem:[%s3 + $0x58] sm:$0xf]
        %v1351 = vld [vmem:[%s3 + $0x5c] sm:$0xf]
        %v1352 = vld [vmem:[%s3 + $0x60] sm:$0xf]
        %v1353 = vld [vmem:[%s3 + $0x64] sm:$0xf]
        %v1354 = vld [vmem:[%s3 + $0x68] sm:$0xf]
        %v1355 = vld [vmem:[%s3 + $0x6c] sm:$0xf]
        %v1356 = vld [vmem:[%s3 + $0x70] sm:$0xf]
        %v1357 = vld [vmem:[%s3 + $0x74] sm:$0xf]
        %v1358 = vld [vmem:[%s3 + $0x78] sm:$0xf]
        %v1359 = vld [vmem:[%s3 + $0x7c] sm:$0xf]
        %v1360 = vld [vmem:[%s4] sm:$0x1]
        %v1393 = vunpack.c.l.b16 %v1328
        %v1394 = vunpack.c.l.b16 %v1329
        %v1395 = vunpack.c.l.b16 %v1330
        %v1396 = vunpack.c.l.b16 %v1331
        %v1397 = vunpack.c.l.b16 %v1332
        %v1398 = vunpack.c.l.b16 %v1333
        %v1399 = vunpack.c.l.b16 %v1334
        %v1400 = vunpack.c.l.b16 %v1335
        %v1401 = vunpack.c.l.b16 %v1336
        %v1402 = vunpack.c.l.b16 %v1337
        %v1403 = vunpack.c.l.b16 %v1338
        %v1404 = vunpack.c.l.b16 %v1339
        %v1405 = vunpack.c.l.b16 %v1340
        %v1406 = vunpack.c.l.b16 %v1341
        %v1407 = vunpack.c.l.b16 %v1342
        %v1408 = vunpack.c.l.b16 %v1343
        %v1409 = vunpack.c.l.b16 %v1344
        %v1410 = vunpack.c.l.b16 %v1345
        %v1411 = vunpack.c.l.b16 %v1346
        %v1412 = vunpack.c.l.b16 %v1347
        %v1413 = vunpack.c.l.b16 %v1348
        %v1414 = vunpack.c.l.b16 %v1349
        %v1415 = vunpack.c.l.b16 %v1350
        %v1416 = vunpack.c.l.b16 %v1351
        %v1417 = vunpack.c.l.b16 %v1352
        %v1418 = vunpack.c.l.b16 %v1353
        %v1419 = vunpack.c.l.b16 %v1354
        %v1420 = vunpack.c.l.b16 %v1355
        %v1421 = vunpack.c.l.b16 %v1356
        %v1422 = vunpack.c.l.b16 %v1357
        %v1423 = vunpack.c.l.b16 %v1358
        %v1424 = vunpack.c.l.b16 %v1359
        %v1425 = vpack.c.b16 %v1394, %v1393
        %v1426 = vpack.c.b16 %v1396, %v1395
        %v1427 = vpack.c.b16 %v1398, %v1397
        %v1428 = vpack.c.b16 %v1400, %v1399
        %v1429 = vpack.c.b16 %v1402, %v1401
        %v1430 = vpack.c.b16 %v1404, %v1403
        %v1431 = vpack.c.b16 %v1406, %v1405
        %v1432 = vpack.c.b16 %v1408, %v1407
        %v1433 = vpack.c.b16 %v1410, %v1409
        %v1434 = vpack.c.b16 %v1412, %v1411
        %v1435 = vpack.c.b16 %v1414, %v1413
        %v1436 = vpack.c.b16 %v1416, %v1415
        %v1437 = vpack.c.b16 %v1418, %v1417
        %v1438 = vpack.c.b16 %v1420, %v1419
        %v1439 = vpack.c.b16 %v1422, %v1421
        %v1440 = vpack.c.b16 %v1424, %v1423
        %1457 = vmatprep.subr.bf16.mxu0 0
        %1458 = vmatpush1.bf16.msra.mxu0 %v1432
        %1459 = vmatprep.subr.bf16.mxu0 0
        %1460 = vmatpush1.bf16.msra.mxu0 %v1431
        %1461 = vmatprep.subr.bf16.mxu0 0
        %1462 = vmatpush1.bf16.msra.mxu0 %v1430
        %1463 = vmatprep.subr.bf16.mxu0 0
        %1464 = vmatpush1.bf16.msra.mxu0 %v1429
        %1465 = vmatprep.subr.bf16.mxu0 0
        %1466 = vmatpush1.bf16.msra.mxu0 %v1428
        %1467 = vmatprep.subr.bf16.mxu0 0
        %1468 = vmatpush1.bf16.msra.mxu0 %v1427
        %1469 = vmatprep.subr.bf16.mxu0 0
        %1470 = vmatpush1.bf16.msra.mxu0 %v1426
        %1471 = vmatprep.subr.bf16.mxu0 0
        %1472 = vmatpush1.bf16.msra.mxu0 %v1425
        %1473 = vmatprep.subr.bf16.mxu0 0
        %1474 = vmatpush2.bf16.msra.mxu0 %v1440
        %1475 = vmatprep.subr.bf16.mxu0 0
        %1476 = vmatpush2.bf16.msra.mxu0 %v1439
        %1477 = vmatprep.subr.bf16.mxu0 0
        %1478 = vmatpush2.bf16.msra.mxu0 %v1438
        %1479 = vmatprep.subr.bf16.mxu0 0
        %1480 = vmatpush2.bf16.msra.mxu0 %v1437
        %1481 = vmatprep.subr.bf16.mxu0 0
        %1482 = vmatpush2.bf16.msra.mxu0 %v1436
        %1483 = vmatprep.subr.bf16.mxu0 0
        %1484 = vmatpush2.bf16.msra.mxu0 %v1435
        %1485 = vmatprep.subr.bf16.mxu0 0
        %1486 = vmatpush2.bf16.msra.mxu0 %v1434
        %1487 = vmatprep.subr.bf16.mxu0 0
        %1488 = vmatpush2.bf16.msra.mxu0 %v1433
        %1489 = vmatprep.mubr.bf16.mxu0 %v1327
        %1490 = vmatmul.mubr.bf16.gmra.mxu0 %v1326
        %v1491 = vpop.f32.mrf.mxu0
        %v1492 = vadd.f32 %v1360, %v1491
        %v1493 = vpop.f32.mrf.mxu0
        %v1494 = vpop.f32.mrf.mxu0
        %v1495 = vpop.f32.mrf.mxu0
        %1496 = vdwg.mxu0
        %v1497 = vmul.f32 %v1492, 0.01
        %v1498 = vmax.f32 %v1492, %v1497
        %v1499 = vpack.c.bf16 %v1498, %v1498
        %v1500 = vld [vmem:[%s5] sm:$0xf]
        %v1501 = vld [vmem:[%s5 + $0x4] sm:$0xf]
        %v1502 = vld [vmem:[%s5 + $0x8] sm:$0xf]
        %v1503 = vld [vmem:[%s5 + $0xc] sm:$0xf]
        %v1504 = vld [vmem:[%s5 + $0x10] sm:$0xf]
        %v1505 = vld [vmem:[%s5 + $0x14] sm:$0xf]
        %v1506 = vld [vmem:[%s5 + $0x18] sm:$0xf]
        %v1507 = vld [vmem:[%s5 + $0x1c] sm:$0xf]
        %v1508 = vld [vmem:[%s5 + $0x20] sm:$0xf]
        %v1509 = vld [vmem:[%s5 + $0x24] sm:$0xf]
        %v1510 = vld [vmem:[%s5 + $0x28] sm:$0xf]
        %v1511 = vld [vmem:[%s5 + $0x2c] sm:$0xf]
        %v1512 = vld [vmem:[%s5 + $0x30] sm:$0xf]
        %v1513 = vld [vmem:[%s5 + $0x34] sm:$0xf]
        %v1514 = vld [vmem:[%s5 + $0x38] sm:$0xf]
        %v1515 = vld [vmem:[%s5 + $0x3c] sm:$0xf]
        %v1516 = vld [vmem:[%s6] sm:$0x1]
        %v1533 = vunpack.c.l.b16 %v1500
        %v1534 = vunpack.c.l.b16 %v1501
        %v1535 = vunpack.c.l.b16 %v1502
        %v1536 = vunpack.c.l.b16 %v1503
        %v1537 = vunpack.c.l.b16 %v1504
        %v1538 = vunpack.c.l.b16 %v1505
        %v1539 = vunpack.c.l.b16 %v1506
        %v1540 = vunpack.c.l.b16 %v1507
        %v1541 = vunpack.c.l.b16 %v1508
        %v1542 = vunpack.c.l.b16 %v1509
        %v1543 = vunpack.c.l.b16 %v1510
        %v1544 = vunpack.c.l.b16 %v1511
        %v1545 = vunpack.c.l.b16 %v1512
        %v1546 = vunpack.c.l.b16 %v1513
        %v1547 = vunpack.c.l.b16 %v1514
        %v1548 = vunpack.c.l.b16 %v1515
        %v1549 = vpack.c.b16 %v1534, %v1533
        %v1550 = vpack.c.b16 %v1536, %v1535
        %v1551 = vpack.c.b16 %v1538, %v1537
        %v1552 = vpack.c.b16 %v1540, %v1539
        %v1553 = vpack.c.b16 %v1542, %v1541
        %v1554 = vpack.c.b16 %v1544, %v1543
        %v1555 = vpack.c.b16 %v1546, %v1545
        %v1556 = vpack.c.b16 %v1548, %v1547
        %1565 = vmatprep.subr.bf16.mxu0 0
        %1566 = vmatpush1.bf16.msra.mxu0 %v1556
        %1567 = vmatprep.subr.bf16.mxu0 0
        %1568 = vmatpush1.bf16.msra.mxu0 %v1555
        %1569 = vmatprep.subr.bf16.mxu0 0
        %1570 = vmatpush1.bf16.msra.mxu0 %v1554
        %1571 = vmatprep.subr.bf16.mxu0 0
        %1572 = vmatpush1.bf16.msra.mxu0 %v1553
        %1573 = vmatprep.subr.bf16.mxu0 0
        %1574 = vmatpush1.bf16.msra.mxu0 %v1552
        %1575 = vmatprep.subr.bf16.mxu0 0
        %1576 = vmatpush1.bf16.msra.mxu0 %v1551
        %1577 = vmatprep.subr.bf16.mxu0 0
        %1578 = vmatpush1.bf16.msra.mxu0 %v1550
        %1579 = vmatprep.subr.bf16.mxu0 0
        %1580 = vmatpush1.bf16.msra.mxu0 %v1549
        %1581 = vmatprep.subr.bf16.mxu0 0
        %1582 = vmatpush2.bf16.msra.mxu0 0
        %1583 = vmatprep.subr.bf16.mxu0 0
        %1584 = vmatpush2.bf16.msra.mxu0 0
        %1585 = vmatprep.subr.bf16.mxu0 0
        %1586 = vmatpush2.bf16.msra.mxu0 0
        %1587 = vmatprep.subr.bf16.mxu0 0
        %1588 = vmatpush2.bf16.msra.mxu0 0
        %1589 = vmatprep.subr.bf16.mxu0 0
        %1590 = vmatpush2.bf16.msra.mxu0 0
        %1591 = vmatprep.subr.bf16.mxu0 0
        %1592 = vmatpush2.bf16.msra.mxu0 0
        %1593 = vmatprep.subr.bf16.mxu0 0
        %1594 = vmatpush2.bf16.msra.mxu0 0
        %1595 = vmatprep.subr.bf16.mxu0 0
        %1596 = vmatpush2.bf16.msra.mxu0 0
        %1597 = vmatprep.mubr.bf16.mxu0 0
        %1598 = vmatmul.mubr.bf16.gmra.mxu0 %v1499
        %v1599 = vpop.f32.mrf.mxu0
        %v1600 = vadd.f32 %v1516, %v1599
        %v1601 = vpop.f32.mrf.mxu0
        %v1602 = vpop.f32.mrf.mxu0
        %v1603 = vpop.f32.mrf.mxu0
        %1604 = vdwg.mxu0
        %v1605 = vmul.f32 %v1600, 0.01
        %v1606 = vmax.f32 %v1600, %v1605
        %v1607 = vpack.c.bf16 %v1606, %v1606
        %v1608 = vld [vmem:[%s7] sm:$0xf]
        %v1609 = vld [vmem:[%s7 + $0x4] sm:$0xf]
        %v1610 = vld [vmem:[%s7 + $0x8] sm:$0xf]
        %v1611 = vld [vmem:[%s7 + $0xc] sm:$0xf]
        %v1612 = vld [vmem:[%s7 + $0x10] sm:$0xf]
        %v1613 = vld [vmem:[%s7 + $0x14] sm:$0xf]
        %v1614 = vld [vmem:[%s7 + $0x18] sm:$0xf]
        %v1615 = vld [vmem:[%s7 + $0x1c] sm:$0xf]
        %v1616 = vld [vmem:[%s8] sm:$0x1]
        %v1625 = vunpack.c.l.b16 %v1608
        %v1626 = vunpack.c.l.b16 %v1609
        %v1627 = vunpack.c.l.b16 %v1610
        %v1628 = vunpack.c.l.b16 %v1611
        %v1629 = vunpack.c.l.b16 %v1612
        %v1630 = vunpack.c.l.b16 %v1613
        %v1631 = vunpack.c.l.b16 %v1614
        %v1632 = vunpack.c.l.b16 %v1615
        %v1633 = vpack.c.b16 %v1626, %v1625
        %v1634 = vpack.c.b16 %v1628, %v1627
        %v1635 = vpack.c.b16 %v1630, %v1629
        %v1636 = vpack.c.b16 %v1632, %v1631
        %vm1641 = vcmask 523264
        %v1643 = vsel %vm1641, %v1607, 0
        %1645 = vmatprep.subr.bf16.mxu0 0
        %1646 = vmatpush1.bf16.msra.mxu0 0
        %1647 = vmatprep.subr.bf16.mxu0 0
        %1648 = vmatpush1.bf16.msra.mxu0 0
        %1649 = vmatprep.subr.bf16.mxu0 0
        %1650 = vmatpush1.bf16.msra.mxu0 0
        %1651 = vmatprep.subr.bf16.mxu0 0
        %1652 = vmatpush1.bf16.msra.mxu0 0
        %1653 = vmatprep.subr.bf16.mxu0 0
        %1654 = vmatpush1.bf16.msra.mxu0 %v1636
        %1655 = vmatprep.subr.bf16.mxu0 0
        %1656 = vmatpush1.bf16.msra.mxu0 %v1635
        %1657 = vmatprep.subr.bf16.mxu0 0
        %1658 = vmatpush1.bf16.msra.mxu0 %v1634
        %1659 = vmatprep.subr.bf16.mxu0 0
        %1660 = vmatpush1.bf16.msra.mxu0 %v1633
        %1661 = vmatprep.subr.bf16.mxu0 0
        %1662 = vmatpush2.bf16.msra.mxu0 0
        %1663 = vmatprep.subr.bf16.mxu0 0
        %1664 = vmatpush2.bf16.msra.mxu0 0
        %1665 = vmatprep.subr.bf16.mxu0 0
        %1666 = vmatpush2.bf16.msra.mxu0 0
        %1667 = vmatprep.subr.bf16.mxu0 0
        %1668 = vmatpush2.bf16.msra.mxu0 0
        %1669 = vmatprep.subr.bf16.mxu0 0
        %1670 = vmatpush2.bf16.msra.mxu0 0
        %1671 = vmatprep.subr.bf16.mxu0 0
        %1672 = vmatpush2.bf16.msra.mxu0 0
        %1673 = vmatprep.subr.bf16.mxu0 0
        %1674 = vmatpush2.bf16.msra.mxu0 0
        %1675 = vmatprep.subr.bf16.mxu0 0
        %1676 = vmatpush2.bf16.msra.mxu0 0
        %1677 = vmatprep.mubr.bf16.mxu0 0
        %1678 = vmatmul.mubr.bf16.gmra.mxu0 %v1643
        %v1679 = vpop.f32.mrf.mxu0
        %v1680 = vadd.f32 %v1616, %v1679
        %v1681 = vpop.f32.mrf.mxu0
        %v1682 = vpop.f32.mrf.mxu0
        %v1683 = vpop.f32.mrf.mxu0
        %1684 = vdwg.mxu0
        %v1685 = vmul.f32 %v1680, 0.01
        %v1686 = vmax.f32 %v1680, %v1685
        %vm1687 = vcmask 253952
        %1688 = vst.msk [vmem:[%s322] sm:$0x1] %vm1687, %v1686
        %s1689 = sand.u32 %s225, 1
        %s1690 = scalar_lea.sflag [#allocation3], %s1689
        %s1691 = sand.u32 %s225, 1
        %s1692 = scalar_lea.vmem [#allocation2], %s1691
        // Predicated region
        $region57: #{flatten_module.1} parent=55 // pred_check
          %p1693 = pneg %p235
        $region58: #{flatten_module.1} parent=55 // pred_check_branch
          %1695 = sbr.rel (%p1693) target = $region60
        $region59: #{flatten_module.1} parent=55 // pred_region
          %s1697 = ssub.s32 16, 16
          %1698 = vsyncadd %s1690, %s1697
          %s1699 = smul.addr %s23, 16
          %s1700 = scalar_lea.hbm %s9, %s1699
          %s1702 = sshll.u32 %s1692, 4
          %s1703 = int_to_ptr.vmem [resolvable:$true] %s1702
          %1705 = dma.vmem_to_hbm [thread:$0]  %s1703, 16, %s1700, %s1690
        $region60: #{flatten_module.1} parent=55 // pred_fallthru
          _
      $region56: #{flatten_module.1} parent=5 // pred_fallthru
        _
      %p1706 = scmp.le.s32.totalorder 2, %s18
      // Predicated region
      $region61: #{flatten_module.1} parent=5 // pred_check
        %p1707 = pneg %p1706
      $region62: #{flatten_module.1} parent=5 // pred_check_branch
        %1709 = sbr.rel (%p1707) target = $region64
      $region63: #{flatten_module.1} parent=5 // pred_region
        %s1710 = ssub.s32 %s18, 2
        // Predicated region
        $region65: #{flatten_module.1} parent=63 // pred_check
          %p1711 = pneg %p241
        $region66: #{flatten_module.1} parent=63 // pred_check_branch
          %1713 = sbr.rel (%p1711) target = $region68
        $region67: #{flatten_module.1} parent=63 // pred_region
          %s1714 = sand.u32 %s226, 1
          %s1715 = scalar_lea.sflag [#allocation3], %s1714
          %s1716 = sand.u32 %s226, 1
          %s1717 = scalar_lea.vmem [#allocation2], %s1716
          %1718 = dma.done %s1715, 16
        $region68: #{flatten_module.1} parent=63 // pred_fallthru
          _
      $region64: #{flatten_module.1} parent=5 // pred_fallthru
        _
    $region6: #{flatten_module.1} parent=1 // loop_footer
      %s22 = sadd.s32 1, %s18
    $region7: #{flatten_module.1} parent=1 // loop_footer_branch
      %17 = sbr.rel target = $region3
    $region8: #{flatten_module.1} parent=1 // loop_exit
      _
    %1719 = vsyncpa [#allocation3], 1
    %s1720 = scalar_lea.sflag [#allocation3], 1
    %1721 = vsyncpa %s1720, 1

</llo_original>
